<compile_context>
chip_gen: v7x
topology: tpu7x:2x2x1
jax: 0.10.0
libtpu: 0.0.40
codegen_flags: <defaults>
</compile_context>

<pallas_src>
import functools

import jax
import jax.numpy as jnp
from jax import lax
from jax.experimental import pallas as pl
from jax.experimental.pallas import tpu as pltpu


# -----------------------------------------------------------------------------
# Kernel 1: single-pass statistics over (b, d, S) for the d != out_dim branch.
# Blocks are (1, d, tile_s): feature on sublanes, spatial on lanes.
# -----------------------------------------------------------------------------
def _stats_kernel(z1_ref, z2_ref,
                  sse_ref, hub_ref, cos_ref, cs1_ref, cs2_ref, g1_ref, g2_ref,
                  sq_acc, hub_acc, cos_acc,
                  *, s_total, tile_s, need_mask,
                  with_l2, with_l1, with_cos, with_var):
    it = pl.program_id(1)
    last_t = pl.num_programs(1) - 1

    @pl.when(it == 0)
    def _init():
        sq_acc[...] = jnp.zeros_like(sq_acc)
        hub_acc[...] = jnp.zeros_like(hub_acc)
        cos_acc[...] = jnp.zeros_like(cos_acc)
        cs1_ref[...] = jnp.zeros_like(cs1_ref)
        cs2_ref[...] = jnp.zeros_like(cs2_ref)
        g1_ref[...] = jnp.zeros_like(g1_ref)
        g2_ref[...] = jnp.zeros_like(g2_ref)

    a = z1_ref[0].astype(jnp.float32)          # (d, tile_s)
    b = z2_ref[0].astype(jnp.float32)

    if need_mask:
        lane = lax.broadcasted_iota(jnp.int32, a.shape, 1)
        valid = (it * tile_s + lane) < s_total
        a = jnp.where(valid, a, 0.0)
        b = jnp.where(valid, b, 0.0)

    diff = a - b
    sq = diff * diff
    if with_l2:
        sq_acc[...] += sq                       # dense, lane-full VPU adds
    if with_l1:
        ad = jnp.abs(diff)
        hub_acc[...] += jnp.where(ad < 1.0, 0.5 * sq, ad - 0.5)
    if with_cos:
        # cosine over the feature (sublane) axis; eps guards zero rows.
        dot_ab = jnp.sum(a * b, axis=0, keepdims=True)       # (1, tile_s)
        nrm2 = (jnp.sum(a * a, axis=0, keepdims=True) *
                jnp.sum(b * b, axis=0, keepdims=True))
        cos_acc[...] += dot_ab * lax.rsqrt(jnp.maximum(nrm2, 1e-16))
    if with_var:
        # per-feature sums and Gram matrices (MXU contracts the spatial axis,
        # no explicit transpose materialized).
        cs1_ref[...] += jnp.sum(a, axis=1, keepdims=True)[None]
        cs2_ref[...] += jnp.sum(b, axis=1, keepdims=True)[None]
        dn = (((1,), (1,)), ((), ()))
        g1_ref[...] += lax.dot_general(
            a, a, dn, preferred_element_type=jnp.float32)[None]
        g2_ref[...] += lax.dot_general(
            b, b, dn, preferred_element_type=jnp.float32)[None]

    @pl.when(it == last_t)
    def _finalize():
        sse_ref[...] = jnp.sum(sq_acc[...], axis=(0, 1),
                               keepdims=True).reshape(1, 1, 1)
        hub_ref[...] = jnp.sum(hub_acc[...], axis=(0, 1),
                               keepdims=True).reshape(1, 1, 1)
        cos_ref[...] = jnp.sum(cos_acc[...], axis=(0, 1),
                               keepdims=True).reshape(1, 1, 1)


def _compute_stats(z1, z2, *, s_total, tile_s, need_mask,
                   with_l2, with_l1, with_cos, with_var):
    B, d, S_arr = z1.shape
    grid = (B, pl.cdiv(S_arr, tile_s))
    kernel = functools.partial(
        _stats_kernel, s_total=s_total, tile_s=tile_s, need_mask=need_mask,
        with_l2=with_l2, with_l1=with_l1, with_cos=with_cos, with_var=with_var)

    out_shape = (
        jax.ShapeDtypeStruct((B, 1, 1), jnp.float32),   # sum (z1-z2)^2
        jax.ShapeDtypeStruct((B, 1, 1), jnp.float32),   # sum smooth_l1
        jax.ShapeDtypeStruct((B, 1, 1), jnp.float32),   # sum cos
        jax.ShapeDtypeStruct((B, d, 1), jnp.float32),   # per-feature sum z1
        jax.ShapeDtypeStruct((B, d, 1), jnp.float32),   # per-feature sum z2
        jax.ShapeDtypeStruct((B, d, d), jnp.float32),   # z1 feature Gram
        jax.ShapeDtypeStruct((B, d, d), jnp.float32),   # z2 feature Gram
    )
    in_specs = [
        pl.BlockSpec((1, d, tile_s), lambda ib, it: (ib, 0, it)),
        pl.BlockSpec((1, d, tile_s), lambda ib, it: (ib, 0, it)),
    ]
    out_specs = (
        pl.BlockSpec((1, 1, 1), lambda ib, it: (ib, 0, 0)),
        pl.BlockSpec((1, 1, 1), lambda ib, it: (ib, 0, 0)),
        pl.BlockSpec((1, 1, 1), lambda ib, it: (ib, 0, 0)),
        pl.BlockSpec((1, d, 1), lambda ib, it: (ib, 0, 0)),
        pl.BlockSpec((1, d, 1), lambda ib, it: (ib, 0, 0)),
        pl.BlockSpec((1, d, d), lambda ib, it: (ib, 0, 0)),
        pl.BlockSpec((1, d, d), lambda ib, it: (ib, 0, 0)),
    )
    scratch_shapes = [
        pltpu.VMEM((d, tile_s), jnp.float32),    # running diff^2
        pltpu.VMEM((d, tile_s), jnp.float32),    # running smooth_l1
        pltpu.VMEM((1, tile_s), jnp.float32),    # running per-column cosine
    ]
    return pl.pallas_call(
        kernel,
        out_shape=out_shape,
        grid=grid,
        in_specs=in_specs,
        out_specs=out_specs,
        scratch_shapes=scratch_shapes,
        compiler_params=pltpu.CompilerParams(
            dimension_semantics=("parallel", "arbitrary"),
            vmem_limit_bytes=48 * 1024 * 1024),
    )(z1, z2)


# -----------------------------------------------------------------------------
# Kernel 2: symmetric cross-entropy sums for the d == out_dim branch.
# -----------------------------------------------------------------------------
def _cce_kernel(z1_ref, z2_ref, ce12_ref, ce21_ref, ce12_acc, ce21_acc,
                *, s_total, tile_s, need_mask):
    it = pl.program_id(1)
    last_t = pl.num_programs(1) - 1

    @pl.when(it == 0)
    def _init():
        ce12_acc[...] = jnp.zeros_like(ce12_acc)
        ce21_acc[...] = jnp.zeros_like(ce21_acc)

    a = z1_ref[0].astype(jnp.float32)            # (d, tile_s)
    b = z2_ref[0].astype(jnp.float32)
    d = a.shape[0]

    col_valid = None
    if need_mask:
        lane = lax.broadcasted_iota(jnp.int32, a.shape, 1)
        valid = (it * tile_s + lane) < s_total
        a = jnp.where(valid, a, 0.0)
        b = jnp.where(valid, b, 0.0)
        col_lane = lax.broadcasted_iota(jnp.int32, (1, a.shape[1]), 1)
        col_valid = (it * tile_s + col_lane) < s_total

    sub = lax.broadcasted_iota(jnp.int32, a.shape, 0)   # feature index / sublane

    def ce_cols(logits, other):
        # cross_entropy(logits, argmax(other)) per spatial column.
        m = jnp.max(logits, axis=0, keepdims=True)
        lse = m + jnp.log(jnp.sum(jnp.exp(logits - m), axis=0, keepdims=True))
        om = jnp.max(other, axis=0, keepdims=True)
        # first-occurrence argmax (matches torch.argmax tie-breaking)
        amax = jnp.min(jnp.where(other == om, sub, d), axis=0, keepdims=True)
        sel = jnp.sum(jnp.where(sub == amax, logits, 0.0),
                      axis=0, keepdims=True)
        ce = lse - sel                                   # (1, tile_s)
        if need_mask:
            ce = jnp.where(col_valid, ce, 0.0)
        return ce

    ce12_acc[...] += ce_cols(a, b)
    ce21_acc[...] += ce_cols(b, a)

    @pl.when(it == last_t)
    def _finalize():
        ce12_ref[...] = jnp.sum(ce12_acc[...], axis=(0, 1),
                                keepdims=True).reshape(1, 1, 1)
        ce21_ref[...] = jnp.sum(ce21_acc[...], axis=(0, 1),
                                keepdims=True).reshape(1, 1, 1)


def _compute_cce(z1, z2, *, s_total, tile_s, need_mask):
    B, d, S_arr = z1.shape
    grid = (B, pl.cdiv(S_arr, tile_s))
    kernel = functools.partial(_cce_kernel, s_total=s_total, tile_s=tile_s,
                               need_mask=need_mask)
    out_shape = (
        jax.ShapeDtypeStruct((B, 1, 1), jnp.float32),
        jax.ShapeDtypeStruct((B, 1, 1), jnp.float32),
    )
    in_specs = [
        pl.BlockSpec((1, d, tile_s), lambda ib, it: (ib, 0, it)),
        pl.BlockSpec((1, d, tile_s), lambda ib, it: (ib, 0, it)),
    ]
    out_specs = (
        pl.BlockSpec((1, 1, 1), lambda ib, it: (ib, 0, 0)),
        pl.BlockSpec((1, 1, 1), lambda ib, it: (ib, 0, 0)),
    )
    scratch_shapes = [
        pltpu.VMEM((1, tile_s), jnp.float32),
        pltpu.VMEM((1, tile_s), jnp.float32),
    ]
    return pl.pallas_call(
        kernel,
        out_shape=out_shape,
        grid=grid,
        in_specs=in_specs,
        out_specs=out_specs,
        scratch_shapes=scratch_shapes,
        compiler_params=pltpu.CompilerParams(
            dimension_semantics=("parallel", "arbitrary"),
            vmem_limit_bytes=48 * 1024 * 1024),
    )(z1, z2)


# -----------------------------------------------------------------------------
# Wrappers reproducing LatentSimilarityLoss / PyramidalLatentSimilarityLoss
# -----------------------------------------------------------------------------
def _choose_tile_s(s_arr, d, itemsize):
    """Largest multiple-of-128 spatial tile within ~10 MiB of resident VMEM."""
    budget = 10 * 1024 * 1024
    # 2 inputs x 2 pipeline buffers + two (d, tile_s) f32 accumulators + lane accs
    per_lane = 4 * d * itemsize + 2 * d * 4 + 96
    t = max(128, (budget // per_lane) // 128 * 128)
    t = min(t, (s_arr // 128) * 128, 65536)
    return int(t)


def _prepare(z):
    """(b, d, x, y, z) -> (b, d, S) with the native layout (free reshape)."""
    b, d = z.shape[0], z.shape[1]
    s = int(z.shape[2] * z.shape[3] * z.shape[4])
    zr = z.reshape(b, d, s)
    if s < 128:  # tiny spatial extent: pad lanes up to one (·,128) tile
        zr = jnp.pad(zr, ((0, 0), (0, 0), (0, 128 - s)))
    return zr, s


@functools.partial(
    jax.jit,
    static_argnames=("l2_weight", "l1_weight", "cce_weight", "cos_weight",
                     "var_loss_weight", "cov_loss_weight", "out_dim"))
def latent_similarity_loss(z1, z2, *,
                           l2_weight=0.0, l1_weight=0.0, cce_weight=0.0,
                           cos_weight=0.0, var_loss_weight=0.0,
                           cov_loss_weight=0.0, out_dim=2):
    b, d = z1.shape[0], z1.shape[1]
    z1r, S = _prepare(z1)
    z2r, _ = _prepare(z2)
    S_arr = z1r.shape[2]
    N = b * S
    itemsize = jnp.dtype(z1.dtype).itemsize
    tile_s = _choose_tile_s(S_arr, d, itemsize)
    need_mask = (S % tile_s) != 0

    loss = jnp.float32(0.0)

    if d == out_dim:
        if cce_weight > 0:
            ce12, ce21 = _compute_cce(z1r, z2r, s_total=S, tile_s=tile_s,
                                      need_mask=need_mask)
            symm_cce = (jnp.sum(ce12) / N + jnp.sum(ce21) / N) / 2.0
            loss = loss + symm_cce * cce_weight
    else:
        with_l2 = l2_weight > 0
        with_l1 = l1_weight > 0
        with_cos = cos_weight > 0
        with_var = var_loss_weight > 0
        if with_l2 or with_l1 or with_cos or with_var:
            sse, hub, coss, cs1, cs2, g1, g2 = _compute_stats(
                z1r, z2r, s_total=S, tile_s=tile_s, need_mask=need_mask,
                with_l2=with_l2, with_l1=with_l1, with_cos=with_cos,
                with_var=with_var)
            if with_l2:
                loss = loss + (jnp.sum(sse) / (N * d)) * l2_weight
            if with_l1:
                loss = loss + (jnp.sum(hub) / (N * d)) * l1_weight
            if with_cos:
                loss = loss + ((N - jnp.sum(coss)) / N) * cos_weight
            if with_var:
                sum1 = jnp.sum(cs1[:, :, 0], axis=0)          # (d,)
                sum2 = jnp.sum(cs2[:, :, 0], axis=0)
                gram1 = jnp.sum(g1, axis=0)                   # (d, d)
                gram2 = jnp.sum(g2, axis=0)
                mean1 = sum1 / N
                mean2 = sum2 / N
                # NOTE: uncentered-moment (Gram - N*mean^2) form, accumulated in
                # f32; equivalent to torch's centered form up to rounding.
                var1 = (jnp.diag(gram1) - N * mean1 * mean1) / (N - 1)
                var2 = (jnp.diag(gram2) - N * mean2 * mean2) / (N - 1)
                std1 = jnp.sqrt(var1 + 0.0001)
                std2 = jnp.sqrt(var2 + 0.0001)
                var_loss = (jnp.mean(jax.nn.relu(1.0 - std1)) / 2.0
                            + jnp.mean(jax.nn.relu(1.0 - std2)) / 2.0)
                loss = loss + jnp.clip(var_loss, 0.0, 1.0) * var_loss_weight
                if cov_loss_weight > 0:
                    cov1 = (gram1 - N * jnp.outer(mean1, mean1)) / (N - 1)
                    cov2 = (gram2 - N * jnp.outer(mean2, mean2)) / (N - 1)

                    def offdiag_sq_mean(c):
                        total = jnp.sum(c * c) - jnp.sum(jnp.diag(c) ** 2)
                        return total / (d * (d - 1))

                    cov_loss = offdiag_sq_mean(cov1) + offdiag_sq_mean(cov2)
                    loss = loss + jnp.clip(cov_loss, 0.0, 1.0) * cov_loss_weight

    return loss * (1000.0 / d ** 3)


def pyramidal_latent_similarity_loss(feature_list1, feature_list2, *,
                                     l2_weight=0.0, l1_weight=0.0,
                                     cce_weight=0.0, cos_weight=0.0,
                                     var_loss_weight=0.0, cov_loss_weight=0.0,
                                     out_dim=2):
    loss = jnp.float32(0.0)
    for f1, f2 in zip(feature_list1, feature_list2):
        loss = loss + latent_similarity_loss(
            f1, f2, l2_weight=l2_weight, l1_weight=l1_weight,
            cce_weight=cce_weight, cos_weight=cos_weight,
            var_loss_weight=var_loss_weight, cov_loss_weight=cov_loss_weight,
            out_dim=out_dim)
    return loss


# -----------------------------------------------------------------------------
# Pure-JAX reference (direct port of the PyTorch forward) for a sanity check.
# -----------------------------------------------------------------------------
def _reference_loss(z1, z2, *, l2_weight=0.0, l1_weight=0.0, cce_weight=0.0,
                    cos_weight=0.0, var_loss_weight=0.0, cov_loss_weight=0.0,
                    out_dim=2):
    b, d = z1.shape[0], z1.shape[1]
    r1 = z1.reshape(b, d, -1).transpose(0, 2, 1).reshape(-1, d).astype(jnp.float32)
    r2 = z2.reshape(b, d, -1).transpose(0, 2, 1).reshape(-1, d).astype(jnp.float32)
    N = r1.shape[0]
    loss = jnp.float32(0.0)
    if d == out_dim:
        if cce_weight > 0:
            def ce(logits, other):
                tgt = jnp.argmax(other, axis=1)
                lse = jax.nn.logsumexp(logits, axis=1)
                sel = jnp.take_along_axis(logits, tgt[:, None], axis=1)[:, 0]
                return jnp.mean(lse - sel)
            loss = loss + (ce(r1, r2) + ce(r2, r1)) / 2.0 * cce_weight
    else:
        diff = r1 - r2
        if l2_weight > 0:
            loss = loss + jnp.mean(diff ** 2) * l2_weight
        if l1_weight > 0:
            ad = jnp.abs(diff)
            loss = loss + jnp.mean(
                jnp.where(ad < 1.0, 0.5 * diff ** 2, ad - 0.5)) * l1_weight
        if cos_weight > 0:
            n1 = jnp.sqrt(jnp.sum(r1 * r1, axis=-1))
            n2 = jnp.sqrt(jnp.sum(r2 * r2, axis=-1))
            cos = jnp.sum(r1 * r2, axis=-1) / (n1 * n2)
            loss = loss + jnp.mean(1.0 - cos) * cos_weight
        if var_loss_weight > 0:
            x = r1 - r1.mean(axis=0)
            y = r2 - r2.mean(axis=0)
            std_x = jnp.sqrt(x.var(axis=0, ddof=1) + 0.0001)
            std_y = jnp.sqrt(y.var(axis=0, ddof=1) + 0.0001)
            var_loss = (jnp.mean(jax.nn.relu(1.0 - std_x)) / 2.0
                        + jnp.mean(jax.nn.relu(1.0 - std_y)) / 2.0)
            loss = loss + jnp.clip(var_loss, 0.0, 1.0) * var_loss_weight
            if cov_loss_weight > 0:
                cov_x = x.T @ x / (N - 1)
                cov_y = y.T @ y / (N - 1)

                def od(c):
                    return ((jnp.sum(c ** 2) - jnp.sum(jnp.diag(c) ** 2))
                            / (d * (d - 1)))

                loss = loss + jnp.clip(od(cov_x) + od(cov_y), 0.0, 1.0) \
                    * cov_loss_weight
    return loss * (1000.0 / d ** 3)


if __name__ == "__main__":
    key = jax.random.PRNGKey(0)
    ks = jax.random.split(key, 6)
    b = 2

    # --- d != out_dim pyramid: all elementwise / var / cov losses active ------
    # Level 0: f32, S = 512 (no masking).  Level 1: bf16, S = 64 (masked tail).
    f1 = [jax.random.normal(ks[0], (b, 8, 8, 8, 8), dtype=jnp.float32),
          jax.random.normal(ks[1], (b, 16, 4, 4, 4), dtype=jnp.bfloat16)]
    f2 = [jax.random.normal(ks[2], (b, 8, 8, 8, 8), dtype=jnp.float32),
          jax.random.normal(ks[3], (b, 16, 4, 4, 4), dtype=jnp.bfloat16)]
    wts = dict(l2_weight=1.0, l1_weight=1.0, cos_weight=1.0,
               var_loss_weight=1.0, cov_loss_weight=1.0, out_dim=2)
    loss = pyramidal_latent_similarity_loss(f1, f2, **wts)
    jax.block_until_ready(loss)
    ref = sum(_reference_loss(a, c, **wts) for a, c in zip(f1, f2))
    assert abs(float(loss) - float(ref)) <= 5e-3 * abs(float(ref)) + 1e-4, \
        (float(loss), float(ref))

    # --- d == out_dim pyramid: symmetric cross-entropy branch -----------------
    g1 = [jax.random.normal(ks[4], (b, 2, 8, 8, 8), dtype=jnp.float32)]
    g2 = [jax.random.normal(ks[5], (b, 2, 8, 8, 8), dtype=jnp.float32)]
    loss_cce = pyramidal_latent_similarity_loss(g1, g2, cce_weight=1.0,
                                                out_dim=2)
    jax.block_until_ready(loss_cce)
    ref_cce = _reference_loss(g1[0], g2[0], cce_weight=1.0, out_dim=2)
    assert abs(float(loss_cce) - float(ref_cce)) \
        <= 5e-3 * abs(float(ref_cce)) + 1e-4, (float(loss_cce), float(ref_cce))

    print("KERNEL_OK")
</pallas_src>

<mosaic_0001>
module attributes {stable_mosaic.version = 11 : i64} {
  func.func @_stats_kernel(%arg0: i32, %arg1: i32, %arg2: memref<1x8x512xf32, #tpu.memory_space<vmem>>, %arg3: memref<1x8x512xf32, #tpu.memory_space<vmem>>, %arg4: memref<1x1x1xf32, #tpu.memory_space<vmem>>, %arg5: memref<1x1x1xf32, #tpu.memory_space<vmem>>, %arg6: memref<1x1x1xf32, #tpu.memory_space<vmem>>, %arg7: memref<1x8x1xf32, #tpu.memory_space<vmem>>, %arg8: memref<1x8x1xf32, #tpu.memory_space<vmem>>, %arg9: memref<1x8x8xf32, #tpu.memory_space<vmem>>, %arg10: memref<1x8x8xf32, #tpu.memory_space<vmem>>, %arg11: memref<8x512xf32, #tpu.memory_space<vmem>>, %arg12: memref<8x512xf32, #tpu.memory_space<vmem>>, %arg13: memref<1x512xf32, #tpu.memory_space<vmem>>) attributes {dimension_semantics = [#tpu.dimension_semantics<parallel>, #tpu.dimension_semantics<arbitrary>], iteration_bounds = array<i64: 2, 1>, scalar_prefetch = 0 : i64, scratch_operands = 3 : i64, tpu.core_type = #tpu.core_type<tc>, window_params = [{transform_indices = @transform_0, window_bounds = array<i64: 1, 8, 512>}, {transform_indices = @transform_1, window_bounds = array<i64: 1, 8, 512>}, {transform_indices = @transform_2, window_bounds = array<i64: 1, 1, 1>}, {transform_indices = @transform_3, window_bounds = array<i64: 1, 1, 1>}, {transform_indices = @transform_4, window_bounds = array<i64: 1, 1, 1>}, {transform_indices = @transform_5, window_bounds = array<i64: 1, 8, 1>}, {transform_indices = @transform_6, window_bounds = array<i64: 1, 8, 1>}, {transform_indices = @transform_7, window_bounds = array<i64: 1, 8, 8>}, {transform_indices = @transform_8, window_bounds = array<i64: 1, 8, 8>}]} {
    %c0_i32 = arith.constant 0 : i32
    %0 = arith.cmpi eq, %arg1, %c0_i32 : i32
    %1 = arith.extui %0 : i1 to i32
    %c0_i32_0 = arith.constant 0 : i32
    %2 = arith.cmpi ne, %1, %c0_i32_0 : i32
    scf.if %2 {
      %cst_54 = arith.constant 0.000000e+00 : f32
      %65 = vector.broadcast %cst_54 : f32 to vector<8x512xf32>
      %c0_55 = arith.constant 0 : index
      %c0_56 = arith.constant 0 : index
      %66 = vector.load %arg11[%c0_55, %c0_56] : memref<8x512xf32, #tpu.memory_space<vmem>>, vector<8x512xf32>
      tpu.vector_store %arg11[%c0_55, %c0_56], %65 {strides = array<i32>} : memref<8x512xf32, #tpu.memory_space<vmem>>, vector<8x512xf32>,
      %cst_57 = arith.constant 0.000000e+00 : f32
      %67 = vector.broadcast %cst_57 : f32 to vector<8x512xf32>
      %c0_58 = arith.constant 0 : index
      %c0_59 = arith.constant 0 : index
      %68 = vector.load %arg12[%c0_58, %c0_59] : memref<8x512xf32, #tpu.memory_space<vmem>>, vector<8x512xf32>
      tpu.vector_store %arg12[%c0_58, %c0_59], %67 {strides = array<i32>} : memref<8x512xf32, #tpu.memory_space<vmem>>, vector<8x512xf32>,
      %cst_60 = arith.constant 0.000000e+00 : f32
      %69 = vector.broadcast %cst_60 : f32 to vector<1x512xf32>
      %c0_61 = arith.constant 0 : index
      %c0_62 = arith.constant 0 : index
      %70 = vector.load %arg13[%c0_61, %c0_62] : memref<1x512xf32, #tpu.memory_space<vmem>>, vector<1x512xf32>
      tpu.vector_store %arg13[%c0_61, %c0_62], %69 {strides = array<i32>} : memref<1x512xf32, #tpu.memory_space<vmem>>, vector<1x512xf32>,
      %cst_63 = arith.constant 0.000000e+00 : f32
      %71 = vector.broadcast %cst_63 : f32 to vector<1x8x1xf32>
      %c0_64 = arith.constant 0 : index
      %c0_65 = arith.constant 0 : index
      %c0_66 = arith.constant 0 : index
      %72 = vector.load %arg7[%c0_64, %c0_65, %c0_66] : memref<1x8x1xf32, #tpu.memory_space<vmem>>, vector<1x8x1xf32>
      tpu.vector_store %arg7[%c0_64, %c0_65, %c0_66], %71 {strides = array<i32>} : memref<1x8x1xf32, #tpu.memory_space<vmem>>, vector<1x8x1xf32>,
      %cst_67 = arith.constant 0.000000e+00 : f32
      %73 = vector.broadcast %cst_67 : f32 to vector<1x8x1xf32>
      %c0_68 = arith.constant 0 : index
      %c0_69 = arith.constant 0 : index
      %c0_70 = arith.constant 0 : index
      %74 = vector.load %arg8[%c0_68, %c0_69, %c0_70] : memref<1x8x1xf32, #tpu.memory_space<vmem>>, vector<1x8x1xf32>
      tpu.vector_store %arg8[%c0_68, %c0_69, %c0_70], %73 {strides = array<i32>} : memref<1x8x1xf32, #tpu.memory_space<vmem>>, vector<1x8x1xf32>,
      %cst_71 = arith.constant 0.000000e+00 : f32
      %75 = vector.broadcast %cst_71 : f32 to vector<1x8x8xf32>
      %c0_72 = arith.constant 0 : index
      %c0_73 = arith.constant 0 : index
      %c0_74 = arith.constant 0 : index
      %76 = vector.load %arg9[%c0_72, %c0_73, %c0_74] : memref<1x8x8xf32, #tpu.memory_space<vmem>>, vector<1x8x8xf32>
      tpu.vector_store %arg9[%c0_72, %c0_73, %c0_74], %75 {strides = array<i32>} : memref<1x8x8xf32, #tpu.memory_space<vmem>>, vector<1x8x8xf32>,
      %cst_75 = arith.constant 0.000000e+00 : f32
      %77 = vector.broadcast %cst_75 : f32 to vector<1x8x8xf32>
      %c0_76 = arith.constant 0 : index
      %c0_77 = arith.constant 0 : index
      %c0_78 = arith.constant 0 : index
      %78 = vector.load %arg10[%c0_76, %c0_77, %c0_78] : memref<1x8x8xf32, #tpu.memory_space<vmem>>, vector<1x8x8xf32>
      tpu.vector_store %arg10[%c0_76, %c0_77, %c0_78], %77 {strides = array<i32>} : memref<1x8x8xf32, #tpu.memory_space<vmem>>, vector<1x8x8xf32>,
    } else {
    }
    %c0 = arith.constant 0 : index
    %c0_1 = arith.constant 0 : index
    %c0_2 = arith.constant 0 : index
    %3 = vector.load %arg2[%c0, %c0_1, %c0_2] : memref<1x8x512xf32, #tpu.memory_space<vmem>>, vector<1x8x512xf32>
    %4 = vector.shape_cast %3 : vector<1x8x512xf32> to vector<8x512xf32>
    %c0_3 = arith.constant 0 : index
    %c0_4 = arith.constant 0 : index
    %c0_5 = arith.constant 0 : index
    %5 = vector.load %arg3[%c0_3, %c0_4, %c0_5] : memref<1x8x512xf32, #tpu.memory_space<vmem>>, vector<1x8x512xf32>
    %6 = vector.shape_cast %5 : vector<1x8x512xf32> to vector<8x512xf32>
    %7 = arith.subf %4, %6 : vector<8x512xf32>
    %8 = arith.mulf %7, %7 : vector<8x512xf32>
    %c0_6 = arith.constant 0 : index
    %c0_7 = arith.constant 0 : index
    %9 = vector.load %arg11[%c0_6, %c0_7] : memref<8x512xf32, #tpu.memory_space<vmem>>, vector<8x512xf32>
    %10 = arith.addf %9, %8 : vector<8x512xf32>
    %c0_8 = arith.constant 0 : index
    %c0_9 = arith.constant 0 : index
    %11 = vector.load %arg11[%c0_8, %c0_9] : memref<8x512xf32, #tpu.memory_space<vmem>>, vector<8x512xf32>
    tpu.vector_store %arg11[%c0_8, %c0_9], %10 {strides = array<i32>} : memref<8x512xf32, #tpu.memory_space<vmem>>, vector<8x512xf32>,
    %12 = math.absf %7 : vector<8x512xf32>
    %c0_10 = arith.constant 0 : index
    %c0_11 = arith.constant 0 : index
    %13 = vector.load %arg12[%c0_10, %c0_11] : memref<8x512xf32, #tpu.memory_space<vmem>>, vector<8x512xf32>
    %cst = arith.constant 1.000000e+00 : f32
    %14 = vector.broadcast %cst : f32 to vector<8x512xf32>
    %15 = arith.cmpf olt, %12, %14 : vector<8x512xf32>
    %cst_12 = arith.constant 5.000000e-01 : f32
    %16 = vector.broadcast %cst_12 : f32 to vector<8x512xf32>
    %17 = arith.mulf %16, %8 : vector<8x512xf32>
    %cst_13 = arith.constant 5.000000e-01 : f32
    %18 = vector.broadcast %cst_13 : f32 to vector<8x512xf32>
    %19 = arith.subf %12, %18 : vector<8x512xf32>
    %20 = arith.select %15, %17, %19 : vector<8x512xi1>, vector<8x512xf32>
    %21 = arith.addf %13, %20 : vector<8x512xf32>
    %c0_14 = arith.constant 0 : index
    %c0_15 = arith.constant 0 : index
    %22 = vector.load %arg12[%c0_14, %c0_15] : memref<8x512xf32, #tpu.memory_space<vmem>>, vector<8x512xf32>
    tpu.vector_store %arg12[%c0_14, %c0_15], %21 {strides = array<i32>} : memref<8x512xf32, #tpu.memory_space<vmem>>, vector<8x512xf32>,
    %23 = arith.mulf %4, %6 : vector<8x512xf32>
    %cst_16 = arith.constant dense<0.000000e+00> : vector<512xf32>
    %24 = vector.multi_reduction <add>, %23, %cst_16 [0] : vector<8x512xf32> to vector<512xf32>
    %25 = vector.shape_cast %24 : vector<512xf32> to vector<1x512xf32>
    %26 = arith.mulf %4, %4 : vector<8x512xf32>
    %cst_17 = arith.constant dense<0.000000e+00> : vector<512xf32>
    %27 = vector.multi_reduction <add>, %26, %cst_17 [0] : vector<8x512xf32> to vector<512xf32>
    %28 = vector.shape_cast %27 : vector<512xf32> to vector<1x512xf32>
    %29 = arith.mulf %6, %6 : vector<8x512xf32>
    %cst_18 = arith.constant dense<0.000000e+00> : vector<512xf32>
    %30 = vector.multi_reduction <add>, %29, %cst_18 [0] : vector<8x512xf32> to vector<512xf32>
    %31 = vector.shape_cast %30 : vector<512xf32> to vector<1x512xf32>
    %32 = arith.mulf %28, %31 : vector<1x512xf32>
    %c0_19 = arith.constant 0 : index
    %c0_20 = arith.constant 0 : index
    %33 = vector.load %arg13[%c0_19, %c0_20] : memref<1x512xf32, #tpu.memory_space<vmem>>, vector<1x512xf32>
    %cst_21 = arith.constant 1.000000e-16 : f32
    %34 = vector.broadcast %cst_21 : f32 to vector<1x512xf32>
    %35 = arith.maximumf %32, %34 : vector<1x512xf32>
    %36 = math.rsqrt %35 : vector<1x512xf32>
    %37 = arith.mulf %25, %36 : vector<1x512xf32>
    %38 = arith.addf %33, %37 : vector<1x512xf32>
    %c0_22 = arith.constant 0 : index
    %c0_23 = arith.constant 0 : index
    %39 = vector.load %arg13[%c0_22, %c0_23] : memref<1x512xf32, #tpu.memory_space<vmem>>, vector<1x512xf32>
    tpu.vector_store %arg13[%c0_22, %c0_23], %38 {strides = array<i32>} : memref<1x512xf32, #tpu.memory_space<vmem>>, vector<1x512xf32>,
    %c0_24 = arith.constant 0 : index
    %c0_25 = arith.constant 0 : index
    %c0_26 = arith.constant 0 : index
    %40 = vector.load %arg7[%c0_24, %c0_25, %c0_26] : memref<1x8x1xf32, #tpu.memory_space<vmem>>, vector<1x8x1xf32>
    %cst_27 = arith.constant dense<0.000000e+00> : vector<8xf32>
    %41 = vector.multi_reduction <add>, %4, %cst_27 [1] : vector<8x512xf32> to vector<8xf32>
    %42 = vector.shape_cast %41 : vector<8xf32> to vector<8x1xf32>
    %43 = vector.shape_cast %42 : vector<8x1xf32> to vector<1x8x1xf32>
    %44 = arith.addf %40, %43 : vector<1x8x1xf32>
    %c0_28 = arith.constant 0 : index
    %c0_29 = arith.constant 0 : index
    %c0_30 = arith.constant 0 : index
    %45 = vector.load %arg7[%c0_28, %c0_29, %c0_30] : memref<1x8x1xf32, #tpu.memory_space<vmem>>, vector<1x8x1xf32>
    tpu.vector_store %arg7[%c0_28, %c0_29, %c0_30], %44 {strides = array<i32>} : memref<1x8x1xf32, #tpu.memory_space<vmem>>, vector<1x8x1xf32>,
    %c0_31 = arith.constant 0 : index
    %c0_32 = arith.constant 0 : index
    %c0_33 = arith.constant 0 : index
    %46 = vector.load %arg8[%c0_31, %c0_32, %c0_33] : memref<1x8x1xf32, #tpu.memory_space<vmem>>, vector<1x8x1xf32>
    %cst_34 = arith.constant dense<0.000000e+00> : vector<8xf32>
    %47 = vector.multi_reduction <add>, %6, %cst_34 [1] : vector<8x512xf32> to vector<8xf32>
    %48 = vector.shape_cast %47 : vector<8xf32> to vector<8x1xf32>
    %49 = vector.shape_cast %48 : vector<8x1xf32> to vector<1x8x1xf32>
    %50 = arith.addf %46, %49 : vector<1x8x1xf32>
    %c0_35 = arith.constant 0 : index
    %c0_36 = arith.constant 0 : index
    %c0_37 = arith.constant 0 : index
    %51 = vector.load %arg8[%c0_35, %c0_36, %c0_37] : memref<1x8x1xf32, #tpu.memory_space<vmem>>, vector<1x8x1xf32>
    tpu.vector_store %arg8[%c0_35, %c0_36, %c0_37], %50 {strides = array<i32>} : memref<1x8x1xf32, #tpu.memory_space<vmem>>, vector<1x8x1xf32>,
    %c0_38 = arith.constant 0 : index
    %c0_39 = arith.constant 0 : index
    %c0_40 = arith.constant 0 : index
    %52 = vector.load %arg9[%c0_38, %c0_39, %c0_40] : memref<1x8x8xf32, #tpu.memory_space<vmem>>, vector<1x8x8xf32>
    %cst_41 = arith.constant dense<0.000000e+00> : vector<8x8xf32>
    %53 = tpu.matmul %4, %4, %cst_41 {dimension_numbers = #tpu.dot_dimension_numbers<[1], [1], [0], [0], [0, 0, 1, 0], [], []>} : vector<8x512xf32>, vector<8x512xf32>, vector<8x8xf32> -> vector<8x8xf32>
    %54 = vector.shape_cast %53 : vector<8x8xf32> to vector<1x8x8xf32>
    %55 = arith.addf %52, %54 : vector<1x8x8xf32>
    %c0_42 = arith.constant 0 : index
    %c0_43 = arith.constant 0 : index
    %c0_44 = arith.constant 0 : index
    %56 = vector.load %arg9[%c0_42, %c0_43, %c0_44] : memref<1x8x8xf32, #tpu.memory_space<vmem>>, vector<1x8x8xf32>
    tpu.vector_store %arg9[%c0_42, %c0_43, %c0_44], %55 {strides = array<i32>} : memref<1x8x8xf32, #tpu.memory_space<vmem>>, vector<1x8x8xf32>,
    %c0_45 = arith.constant 0 : index
    %c0_46 = arith.constant 0 : index
    %c0_47 = arith.constant 0 : index
    %57 = vector.load %arg10[%c0_45, %c0_46, %c0_47] : memref<1x8x8xf32, #tpu.memory_space<vmem>>, vector<1x8x8xf32>
    %cst_48 = arith.constant dense<0.000000e+00> : vector<8x8xf32>
    %58 = tpu.matmul %6, %6, %cst_48 {dimension_numbers = #tpu.dot_dimension_numbers<[1], [1], [0], [0], [0, 0, 1, 0], [], []>} : vector<8x512xf32>, vector<8x512xf32>, vector<8x8xf32> -> vector<8x8xf32>
    %59 = vector.shape_cast %58 : vector<8x8xf32> to vector<1x8x8xf32>
    %60 = arith.addf %57, %59 : vector<1x8x8xf32>
    %c0_49 = arith.constant 0 : index
    %c0_50 = arith.constant 0 : index
    %c0_51 = arith.constant 0 : index
    %61 = vector.load %arg10[%c0_49, %c0_50, %c0_51] : memref<1x8x8xf32, #tpu.memory_space<vmem>>, vector<1x8x8xf32>
    tpu.vector_store %arg10[%c0_49, %c0_50, %c0_51], %60 {strides = array<i32>} : memref<1x8x8xf32, #tpu.memory_space<vmem>>, vector<1x8x8xf32>,
    %c0_i32_52 = arith.constant 0 : i32
    %62 = arith.cmpi eq, %arg1, %c0_i32_52 : i32
    %63 = arith.extui %62 : i1 to i32
    %c0_i32_53 = arith.constant 0 : i32
    %64 = arith.cmpi ne, %63, %c0_i32_53 : i32
    scf.if %64 {
      %c0_54 = arith.constant 0 : index
      %c0_55 = arith.constant 0 : index
      %65 = vector.load %arg11[%c0_54, %c0_55] : memref<8x512xf32, #tpu.memory_space<vmem>>, vector<8x512xf32>
      %66 = vector.shape_cast %65 : vector<8x512xf32> to vector<1x8x512xf32>
      %cst_56 = arith.constant dense<0.000000e+00> : vector<1xf32>
      %67 = vector.multi_reduction <add>, %66, %cst_56 [1, 2] : vector<1x8x512xf32> to vector<1xf32>
      %68 = vector.shape_cast %67 : vector<1xf32> to vector<1x1x1xf32>
      %69 = vector.extract %68[0, 0, 0] : f32 from vector<1x1x1xf32>
      %70 = vector.broadcast %69 : f32 to vector<1x1xf32>
      %71 = vector.shape_cast %70 : vector<1x1xf32> to vector<1x1x1xf32>
      %c0_57 = arith.constant 0 : index
      %c0_58 = arith.constant 0 : index
      %c0_59 = arith.constant 0 : index
      %72 = vector.load %arg4[%c0_57, %c0_58, %c0_59] : memref<1x1x1xf32, #tpu.memory_space<vmem>>, vector<1x1x1xf32>
      tpu.vector_store %arg4[%c0_57, %c0_58, %c0_59], %71 {strides = array<i32>} : memref<1x1x1xf32, #tpu.memory_space<vmem>>, vector<1x1x1xf32>,
      %c0_60 = arith.constant 0 : index
      %c0_61 = arith.constant 0 : index
      %73 = vector.load %arg12[%c0_60, %c0_61] : memref<8x512xf32, #tpu.memory_space<vmem>>, vector<8x512xf32>
      %74 = vector.shape_cast %73 : vector<8x512xf32> to vector<1x8x512xf32>
      %cst_62 = arith.constant dense<0.000000e+00> : vector<1xf32>
      %75 = vector.multi_reduction <add>, %74, %cst_62 [1, 2] : vector<1x8x512xf32> to vector<1xf32>
      %76 = vector.shape_cast %75 : vector<1xf32> to vector<1x1x1xf32>
      %77 = vector.extract %76[0, 0, 0] : f32 from vector<1x1x1xf32>
      %78 = vector.broadcast %77 : f32 to vector<1x1xf32>
      %79 = vector.shape_cast %78 : vector<1x1xf32> to vector<1x1x1xf32>
      %c0_63 = arith.constant 0 : index
      %c0_64 = arith.constant 0 : index
      %c0_65 = arith.constant 0 : index
      %80 = vector.load %arg5[%c0_63, %c0_64, %c0_65] : memref<1x1x1xf32, #tpu.memory_space<vmem>>, vector<1x1x1xf32>
      tpu.vector_store %arg5[%c0_63, %c0_64, %c0_65], %79 {strides = array<i32>} : memref<1x1x1xf32, #tpu.memory_space<vmem>>, vector<1x1x1xf32>,
      %c0_66 = arith.constant 0 : index
      %c0_67 = arith.constant 0 : index
      %81 = vector.load %arg13[%c0_66, %c0_67] : memref<1x512xf32, #tpu.memory_space<vmem>>, vector<1x512xf32>
      %82 = vector.shape_cast %81 : vector<1x512xf32> to vector<1x1x512xf32>
      %cst_68 = arith.constant dense<0.000000e+00> : vector<1xf32>
      %83 = vector.multi_reduction <add>, %82, %cst_68 [1, 2] : vector<1x1x512xf32> to vector<1xf32>
      %84 = vector.shape_cast %83 : vector<1xf32> to vector<1x1x1xf32>
      %85 = vector.extract %84[0, 0, 0] : f32 from vector<1x1x1xf32>
      %86 = vector.broadcast %85 : f32 to vector<1x1xf32>
      %87 = vector.shape_cast %86 : vector<1x1xf32> to vector<1x1x1xf32>
      %c0_69 = arith.constant 0 : index
      %c0_70 = arith.constant 0 : index
      %c0_71 = arith.constant 0 : index
      %88 = vector.load %arg6[%c0_69, %c0_70, %c0_71] : memref<1x1x1xf32, #tpu.memory_space<vmem>>, vector<1x1x1xf32>
      tpu.vector_store %arg6[%c0_69, %c0_70, %c0_71], %87 {strides = array<i32>} : memref<1x1x1xf32, #tpu.memory_space<vmem>>, vector<1x1x1xf32>,
    } else {
    }
    return
  }
  func.func @transform_0(%arg0: i32, %arg1: i32) -> (i32, i32, i32) {
    %c0_i32 = arith.constant 0 : i32
    %c0_i32_0 = arith.constant 0 : i32
    return %arg0, %c0_i32, %arg1 : i32, i32, i32
  }
  func.func @transform_1(%arg0: i32, %arg1: i32) -> (i32, i32, i32) {
    %c0_i32 = arith.constant 0 : i32
    %c0_i32_0 = arith.constant 0 : i32
    return %arg0, %c0_i32, %arg1 : i32, i32, i32
  }
  func.func @transform_2(%arg0: i32, %arg1: i32) -> (i32, i32, i32) {
    %c0_i32 = arith.constant 0 : i32
    %c0_i32_0 = arith.constant 0 : i32
    %c0_i32_1 = arith.constant 0 : i32
    return %arg0, %c0_i32, %c0_i32_0 : i32, i32, i32
  }
  func.func @transform_3(%arg0: i32, %arg1: i32) -> (i32, i32, i32) {
    %c0_i32 = arith.constant 0 : i32
    %c0_i32_0 = arith.constant 0 : i32
    %c0_i32_1 = arith.constant 0 : i32
    return %arg0, %c0_i32, %c0_i32_0 : i32, i32, i32
  }
  func.func @transform_4(%arg0: i32, %arg1: i32) -> (i32, i32, i32) {
    %c0_i32 = arith.constant 0 : i32
    %c0_i32_0 = arith.constant 0 : i32
    %c0_i32_1 = arith.constant 0 : i32
    return %arg0, %c0_i32, %c0_i32_0 : i32, i32, i32
  }
  func.func @transform_5(%arg0: i32, %arg1: i32) -> (i32, i32, i32) {
    %c0_i32 = arith.constant 0 : i32
    %c0_i32_0 = arith.constant 0 : i32
    %c0_i32_1 = arith.constant 0 : i32
    return %arg0, %c0_i32, %c0_i32_0 : i32, i32, i32
  }
  func.func @transform_6(%arg0: i32, %arg1: i32) -> (i32, i32, i32) {
    %c0_i32 = arith.constant 0 : i32
    %c0_i32_0 = arith.constant 0 : i32
    %c0_i32_1 = arith.constant 0 : i32
    return %arg0, %c0_i32, %c0_i32_0 : i32, i32, i32
  }
  func.func @transform_7(%arg0: i32, %arg1: i32) -> (i32, i32, i32) {
    %c0_i32 = arith.constant 0 : i32
    %c0_i32_0 = arith.constant 0 : i32
    %c0_i32_1 = arith.constant 0 : i32
    return %arg0, %c0_i32, %c0_i32_0 : i32, i32, i32
  }
  func.func @transform_8(%arg0: i32, %arg1: i32) -> (i32, i32, i32) {
    %c0_i32 = arith.constant 0 : i32
    %c0_i32_0 = arith.constant 0 : i32
    %c0_i32_1 = arith.constant 0 : i32
    return %arg0, %c0_i32, %c0_i32_0 : i32, i32, i32
  }
}

</mosaic_0001>

<llo_original>
// kernel: latent_similarity_loss.1
$region0: #{latent_similarity_loss.1}
  #allocation0 [shape = 'u32[]', space=smem, size = 0x4, offset = 0x4, fixed_abs, tag = 'smem constant byte address 0x4 - core index']
  #allocation1 [shape = 'u32[144,128]{1,0:T(1,128)}', space=vmem, size = 0x12000, scoped, tag = 'internal scratch']
  #allocation2 [shape = 'f32[8,512]{1,0:T(8,128)}', space=vmem, size = 0x4000, scoped, tag = 'scratch operand']
  #allocation3 [shape = 'f32[8,512]{1,0:T(8,128)}', space=vmem, size = 0x4000, scoped, tag = 'scratch operand']
  #allocation4 [shape = 'f32[1,512]{1,0:T(1,128)}', space=vmem, size = 0x800, scoped, tag = 'scratch operand']
  %s0 = inlined_call_operand.vmem [shape: f32[2,8,512], index: 0, kind: input, shape index: {}]
  %s1 = inlined_call_operand.vmem [shape: f32[2,8,512], index: 1, kind: input, shape index: {}]
  %s2 = inlined_call_operand.vmem [shape: f32[2,1,1], index: 2, kind: output, shape index: {0}]
  %s3 = inlined_call_operand.vmem [shape: f32[2,1,1], index: 3, kind: output, shape index: {1}]
  %s4 = inlined_call_operand.vmem [shape: f32[2,1,1], index: 4, kind: output, shape index: {2}]
  %s5 = inlined_call_operand.vmem [shape: f32[2,8,1], index: 5, kind: output, shape index: {3}]
  %s6 = inlined_call_operand.vmem [shape: f32[2,8,1], index: 6, kind: output, shape index: {4}]
  %s7 = inlined_call_operand.vmem [shape: f32[2,8,8], index: 7, kind: output, shape index: {5}]
  %s8 = inlined_call_operand.vmem [shape: f32[2,8,8], index: 8, kind: output, shape index: {6}]
  %9 = xla_tuple %s2, %s3, %s4, %s5, %s6, %s7, %s8
  %s10 = sld [smem:[#allocation0]]
  $region97: #{latent_similarity_loss.1} parent=0
    _
  %s12 = ssub.s32 1, %s10
  %s13 = scalar_select 0, %s12, %s10
  loop: start=0, step=1, limit=4
  $region2: #{latent_similarity_loss.1} parent=0 // loop_pre_header
    _
  $region3: #{latent_similarity_loss.1} parent=0 // loop_header
    %s15 = sphi 0, %s19
    %p16 = scmp.ge.s32.totalorder %s15, 4
    %s22 = sphi 0, %s34
    %s23 = sphi 0, %s30
    %s24 = sphi 0, %s22
    %s25 = sphi 0, %s23
    %s26 = sphi 0, %s24
    %s27 = sphi 0, %s25
    %s39 = sphi 0, %s41
    %s42 = sphi 0, %s39
    %s43 = sphi 0, %s42
    %s59 = sphi 0, %s43
    %s67 = sphi 0, %s69
    %s70 = sphi 0, %s67
    %s71 = sphi 0, %s70
    %s87 = sphi 0, %s71
    %s93 = sphi 0, %s95
    %s96 = sphi 0, %s93
    %s97 = sphi 0, %s96
    %s113 = sphi 0, %s97
    %s119 = sphi 0, %s121
    %s122 = sphi 0, %s119
    %s123 = sphi 0, %s122
    %s139 = sphi 0, %s123
    %s145 = sphi 0, %s147
    %s148 = sphi 0, %s145
    %s149 = sphi 0, %s148
    %s165 = sphi 0, %s149
    %s171 = sphi 0, %s173
    %s174 = sphi 0, %s171
    %s175 = sphi 0, %s174
    %s191 = sphi 0, %s175
    %s197 = sphi 0, %s199
    %s200 = sphi 0, %s197
    %s201 = sphi 0, %s200
    %s217 = sphi 0, %s201
    %s223 = sphi 0, %s225
    %s226 = sphi 0, %s223
    %s227 = sphi 0, %s226
    %s243 = sphi 0, %s227
    %s249 = sphi 0, %s251
    %s252 = sphi 0, %s249
    %s253 = sphi 0, %s252
    %s269 = sphi 0, %s253
  $region4: #{latent_similarity_loss.1} parent=0 // loop_header_branch
    %18 = sbr.rel (%p16) target = $region8
  $region5: #{latent_similarity_loss.1} parent=0 // loop_body
    %s20 = ssub.s32 %s15, 1
    %s21 = ssub.s32 %s15, 2
    %s28 = sadd.s32 1, %s23
    %p29 = scmp.ge.s32.totalorder %s28, 1
    %s30 = scalar_select %p29, 0, %s28
    %s31 = sadd.s32 1, %s22
    %s32 = scalar_select %p29, %s31, %s22
    %p33 = scmp.ge.s32.totalorder %s32, 2
    %s34 = scalar_select %p33, 0, %s32
    %s35 = ssub.s32 %s22, %s34
    %s36 = ssub.s32 %s23, %s30
    %s37 = sor.u32 %s35, %s36
    %p38 = scmp.eq.s32.totalorder %s37, 0
    %s40 = sadd.s32 %s39, 1
    %s41 = scalar_select %p38, %s39, %s40
    %p44 = pneg %p38
    %p45 = scmp.eq.s32.totalorder %s15, 1
    %p46 = por %p44, %p45
    %p47 = scmp.ne.s32.totalorder %s39, %s42
    %p48 = scmp.eq.s32.totalorder %s15, 0
    %p49 = por %p47, %p48
    %p50 = scmp.ne.s32.totalorder %s39, %s42
    %p51 = scmp.eq.s32.totalorder %s20, 1
    %p52 = por %p50, %p51
    %p53 = scmp.ne.s32.totalorder %s42, %s43
    %p54 = scmp.eq.s32.totalorder %s20, 0
    %p55 = por %p53, %p54
    %p56 = scmp.ne.s32.totalorder %s42, %s43
    %p57 = scmp.eq.s32.totalorder %s21, 1
    %p58 = por %p56, %p57
    %p60 = scmp.ne.s32.totalorder %s43, %s59
    %p61 = scmp.eq.s32.totalorder %s21, 0
    %p62 = por %p60, %p61
    %s63 = ssub.s32 %s22, %s34
    %s64 = ssub.s32 %s23, %s30
    %s65 = sor.u32 %s63, %s64
    %p66 = scmp.eq.s32.totalorder %s65, 0
    %s68 = sadd.s32 %s67, 1
    %s69 = scalar_select %p66, %s67, %s68
    %p72 = pneg %p66
    %p73 = scmp.eq.s32.totalorder %s15, 1
    %p74 = por %p72, %p73
    %p75 = scmp.ne.s32.totalorder %s67, %s70
    %p76 = scmp.eq.s32.totalorder %s15, 0
    %p77 = por %p75, %p76
    %p78 = scmp.ne.s32.totalorder %s67, %s70
    %p79 = scmp.eq.s32.totalorder %s20, 1
    %p80 = por %p78, %p79
    %p81 = scmp.ne.s32.totalorder %s70, %s71
    %p82 = scmp.eq.s32.totalorder %s20, 0
    %p83 = por %p81, %p82
    %p84 = scmp.ne.s32.totalorder %s70, %s71
    %p85 = scmp.eq.s32.totalorder %s21, 1
    %p86 = por %p84, %p85
    %p88 = scmp.ne.s32.totalorder %s71, %s87
    %p89 = scmp.eq.s32.totalorder %s21, 0
    %p90 = por %p88, %p89
    %s91 = ssub.s32 %s22, %s34
    %p92 = scmp.eq.s32.totalorder %s91, 0
    %s94 = sadd.s32 %s93, 1
    %s95 = scalar_select %p92, %s93, %s94
    %p98 = pneg %p92
    %p99 = scmp.eq.s32.totalorder %s15, 1
    %p100 = por %p98, %p99
    %p101 = scmp.ne.s32.totalorder %s93, %s96
    %p102 = scmp.eq.s32.totalorder %s15, 0
    %p103 = por %p101, %p102
    %p104 = scmp.ne.s32.totalorder %s93, %s96
    %p105 = scmp.eq.s32.totalorder %s20, 1
    %p106 = por %p104, %p105
    %p107 = scmp.ne.s32.totalorder %s96, %s97
    %p108 = scmp.eq.s32.totalorder %s20, 0
    %p109 = por %p107, %p108
    %p110 = scmp.ne.s32.totalorder %s96, %s97
    %p111 = scmp.eq.s32.totalorder %s21, 1
    %p112 = por %p110, %p111
    %p114 = scmp.ne.s32.totalorder %s97, %s113
    %p115 = scmp.eq.s32.totalorder %s21, 0
    %p116 = por %p114, %p115
    %s117 = ssub.s32 %s22, %s34
    %p118 = scmp.eq.s32.totalorder %s117, 0
    %s120 = sadd.s32 %s119, 1
    %s121 = scalar_select %p118, %s119, %s120
    %p124 = pneg %p118
    %p125 = scmp.eq.s32.totalorder %s15, 1
    %p126 = por %p124, %p125
    %p127 = scmp.ne.s32.totalorder %s119, %s122
    %p128 = scmp.eq.s32.totalorder %s15, 0
    %p129 = por %p127, %p128
    %p130 = scmp.ne.s32.totalorder %s119, %s122
    %p131 = scmp.eq.s32.totalorder %s20, 1
    %p132 = por %p130, %p131
    %p133 = scmp.ne.s32.totalorder %s122, %s123
    %p134 = scmp.eq.s32.totalorder %s20, 0
    %p135 = por %p133, %p134
    %p136 = scmp.ne.s32.totalorder %s122, %s123
    %p137 = scmp.eq.s32.totalorder %s21, 1
    %p138 = por %p136, %p137
    %p140 = scmp.ne.s32.totalorder %s123, %s139
    %p141 = scmp.eq.s32.totalorder %s21, 0
    %p142 = por %p140, %p141
    %s143 = ssub.s32 %s22, %s34
    %p144 = scmp.eq.s32.totalorder %s143, 0
    %s146 = sadd.s32 %s145, 1
    %s147 = scalar_select %p144, %s145, %s146
    %p150 = pneg %p144
    %p151 = scmp.eq.s32.totalorder %s15, 1
    %p152 = por %p150, %p151
    %p153 = scmp.ne.s32.totalorder %s145, %s148
    %p154 = scmp.eq.s32.totalorder %s15, 0
    %p155 = por %p153, %p154
    %p156 = scmp.ne.s32.totalorder %s145, %s148
    %p157 = scmp.eq.s32.totalorder %s20, 1
    %p158 = por %p156, %p157
    %p159 = scmp.ne.s32.totalorder %s148, %s149
    %p160 = scmp.eq.s32.totalorder %s20, 0
    %p161 = por %p159, %p160
    %p162 = scmp.ne.s32.totalorder %s148, %s149
    %p163 = scmp.eq.s32.totalorder %s21, 1
    %p164 = por %p162, %p163
    %p166 = scmp.ne.s32.totalorder %s149, %s165
    %p167 = scmp.eq.s32.totalorder %s21, 0
    %p168 = por %p166, %p167
    %s169 = ssub.s32 %s22, %s34
    %p170 = scmp.eq.s32.totalorder %s169, 0
    %s172 = sadd.s32 %s171, 1
    %s173 = scalar_select %p170, %s171, %s172
    %p176 = pneg %p170
    %p177 = scmp.eq.s32.totalorder %s15, 1
    %p178 = por %p176, %p177
    %p179 = scmp.ne.s32.totalorder %s171, %s174
    %p180 = scmp.eq.s32.totalorder %s15, 0
    %p181 = por %p179, %p180
    %p182 = scmp.ne.s32.totalorder %s171, %s174
    %p183 = scmp.eq.s32.totalorder %s20, 1
    %p184 = por %p182, %p183
    %p185 = scmp.ne.s32.totalorder %s174, %s175
    %p186 = scmp.eq.s32.totalorder %s20, 0
    %p187 = por %p185, %p186
    %p188 = scmp.ne.s32.totalorder %s174, %s175
    %p189 = scmp.eq.s32.totalorder %s21, 1
    %p190 = por %p188, %p189
    %p192 = scmp.ne.s32.totalorder %s175, %s191
    %p193 = scmp.eq.s32.totalorder %s21, 0
    %p194 = por %p192, %p193
    %s195 = ssub.s32 %s22, %s34
    %p196 = scmp.eq.s32.totalorder %s195, 0
    %s198 = sadd.s32 %s197, 1
    %s199 = scalar_select %p196, %s197, %s198
    %p202 = pneg %p196
    %p203 = scmp.eq.s32.totalorder %s15, 1
    %p204 = por %p202, %p203
    %p205 = scmp.ne.s32.totalorder %s197, %s200
    %p206 = scmp.eq.s32.totalorder %s15, 0
    %p207 = por %p205, %p206
    %p208 = scmp.ne.s32.totalorder %s197, %s200
    %p209 = scmp.eq.s32.totalorder %s20, 1
    %p210 = por %p208, %p209
    %p211 = scmp.ne.s32.totalorder %s200, %s201
    %p212 = scmp.eq.s32.totalorder %s20, 0
    %p213 = por %p211, %p212
    %p214 = scmp.ne.s32.totalorder %s200, %s201
    %p215 = scmp.eq.s32.totalorder %s21, 1
    %p216 = por %p214, %p215
    %p218 = scmp.ne.s32.totalorder %s201, %s217
    %p219 = scmp.eq.s32.totalorder %s21, 0
    %p220 = por %p218, %p219
    %s221 = ssub.s32 %s22, %s34
    %p222 = scmp.eq.s32.totalorder %s221, 0
    %s224 = sadd.s32 %s223, 1
    %s225 = scalar_select %p222, %s223, %s224
    %p228 = pneg %p222
    %p229 = scmp.eq.s32.totalorder %s15, 1
    %p230 = por %p228, %p229
    %p231 = scmp.ne.s32.totalorder %s223, %s226
    %p232 = scmp.eq.s32.totalorder %s15, 0
    %p233 = por %p231, %p232
    %p234 = scmp.ne.s32.totalorder %s223, %s226
    %p235 = scmp.eq.s32.totalorder %s20, 1
    %p236 = por %p234, %p235
    %p237 = scmp.ne.s32.totalorder %s226, %s227
    %p238 = scmp.eq.s32.totalorder %s20, 0
    %p239 = por %p237, %p238
    %p240 = scmp.ne.s32.totalorder %s226, %s227
    %p241 = scmp.eq.s32.totalorder %s21, 1
    %p242 = por %p240, %p241
    %p244 = scmp.ne.s32.totalorder %s227, %s243
    %p245 = scmp.eq.s32.totalorder %s21, 0
    %p246 = por %p244, %p245
    %s247 = ssub.s32 %s22, %s34
    %p248 = scmp.eq.s32.totalorder %s247, 0
    %s250 = sadd.s32 %s249, 1
    %s251 = scalar_select %p248, %s249, %s250
    %p254 = pneg %p248
    %p255 = scmp.eq.s32.totalorder %s15, 1
    %p256 = por %p254, %p255
    %p257 = scmp.ne.s32.totalorder %s249, %s252
    %p258 = scmp.eq.s32.totalorder %s15, 0
    %p259 = por %p257, %p258
    %p260 = scmp.ne.s32.totalorder %s249, %s252
    %p261 = scmp.eq.s32.totalorder %s20, 1
    %p262 = por %p260, %p261
    %p263 = scmp.ne.s32.totalorder %s252, %s253
    %p264 = scmp.eq.s32.totalorder %s20, 0
    %p265 = por %p263, %p264
    %p266 = scmp.ne.s32.totalorder %s252, %s253
    %p267 = scmp.eq.s32.totalorder %s21, 1
    %p268 = por %p266, %p267
    %p270 = scmp.ne.s32.totalorder %s253, %s269
    %p271 = scmp.eq.s32.totalorder %s21, 0
    %p272 = por %p270, %p271
    %p273 = scmp.le.s32.totalorder 1, %s15
    %p274 = scmp.lt.s32.totalorder %s15, 3
    %p275 = pnand %p273, %p274
    %p276 = pneg %p275
    // Predicated region
    $region9: #{latent_similarity_loss.1} parent=5 // pred_check
      _
    $region10: #{latent_similarity_loss.1} parent=5 // pred_check_branch
      %278 = sbr.rel (%p275) target = $region12
    $region11: #{latent_similarity_loss.1} parent=5 // pred_region
      %s279 = ssub.s32 %s15, 1
    $region12: #{latent_similarity_loss.1} parent=5 // pred_fallthru
      _
    %p280 = scmp.lt.s32.totalorder %s15, 2
    // Predicated region
    $region13: #{latent_similarity_loss.1} parent=5 // pred_check
      %p281 = pneg %p280
    $region14: #{latent_similarity_loss.1} parent=5 // pred_check_branch
      %283 = sbr.rel (%p281) target = $region16
    $region15: #{latent_similarity_loss.1} parent=5 // pred_region
      // Predicated region
      $region17: #{latent_similarity_loss.1} parent=15 // pred_check
        %p284 = pneg %p49
      $region18: #{latent_similarity_loss.1} parent=15 // pred_check_branch
        %286 = sbr.rel (%p284) target = $region20
      $region19: #{latent_similarity_loss.1} parent=15 // pred_region
        %s287 = smul.u32 4, %s23
        %p288 = scmp.lt.s32.totalorder %s22, 1
        %s289 = scalar_select %p288, %s22, 1
        %p290 = scmp.lt.s32.totalorder %s287, 3
        %s291 = scalar_select %p290, %s287, 3
        %s292 = smul.addr %s289, 4
        %s293 = sadd.s32 %s291, %s292
        %s294 = smul.addr %s293, 8
        %s295 = scalar_lea.vmem %s0, %s294
        %s296 = smul.u32 4, %s23
      $region20: #{latent_similarity_loss.1} parent=15 // pred_fallthru
        _
      // Predicated region
      $region21: #{latent_similarity_loss.1} parent=15 // pred_check
        %p297 = pneg %p77
      $region22: #{latent_similarity_loss.1} parent=15 // pred_check_branch
        %299 = sbr.rel (%p297) target = $region24
      $region23: #{latent_similarity_loss.1} parent=15 // pred_region
        %s300 = smul.u32 4, %s23
        %p301 = scmp.lt.s32.totalorder %s22, 1
        %s302 = scalar_select %p301, %s22, 1
        %p303 = scmp.lt.s32.totalorder %s300, 3
        %s304 = scalar_select %p303, %s300, 3
        %s305 = smul.addr %s302, 4
        %s306 = sadd.s32 %s304, %s305
        %s307 = smul.addr %s306, 8
        %s308 = scalar_lea.vmem %s1, %s307
        %s309 = smul.u32 4, %s23
      $region24: #{latent_similarity_loss.1} parent=15 // pred_fallthru
        _
    $region16: #{latent_similarity_loss.1} parent=5 // pred_fallthru
      _
    %p310 = scmp.le.s32.totalorder 1, %s15
    %p311 = scmp.lt.s32.totalorder %s15, 3
    %p312 = pnand %p310, %p311
    %p313 = pneg %p312
    // Predicated region
    $region25: #{latent_similarity_loss.1} parent=5 // pred_check
      _
    $region26: #{latent_similarity_loss.1} parent=5 // pred_check_branch
      %315 = sbr.rel (%p312) target = $region28
    $region27: #{latent_similarity_loss.1} parent=5 // pred_region
      %s316 = ssub.s32 %s15, 1
      %s317 = smul.u32 4, %s25
      %p318 = scmp.lt.s32.totalorder %s24, 1
      %s319 = scalar_select %p318, %s24, 1
      %p320 = scmp.lt.s32.totalorder %s317, 3
      %s321 = scalar_select %p320, %s317, 3
      %s322 = smul.addr %s319, 4
      %s323 = sadd.s32 %s321, %s322
      %s324 = smul.addr %s323, 8
      %s325 = scalar_lea.vmem %s0, %s324
      %p326 = pneg %p55
      %p327 = pneg %p52
      %s328 = smul.u32 4, %s25
      %p329 = scmp.lt.s32.totalorder %s24, 1
      %s330 = scalar_select %p329, %s24, 1
      %p331 = scmp.lt.s32.totalorder %s328, 3
      %s332 = scalar_select %p331, %s328, 3
      %s333 = smul.addr %s330, 4
      %s334 = sadd.s32 %s332, %s333
      %s335 = smul.addr %s334, 8
      %s336 = scalar_lea.vmem %s1, %s335
      %p337 = pneg %p83
      %p338 = pneg %p80
      %p339 = pneg %p109
      %p340 = pneg %p106
      %p341 = scmp.lt.s32.totalorder %s24, 1
      %s342 = scalar_select %p341, %s24, 1
      %s343 = scalar_lea.vmem %s2, %s342
      %p344 = pneg %p135
      %p345 = pneg %p132
      %p346 = scmp.lt.s32.totalorder %s24, 1
      %s347 = scalar_select %p346, %s24, 1
      %s348 = scalar_lea.vmem %s3, %s347
      %p349 = pneg %p161
      %p350 = pneg %p158
      %p351 = scmp.lt.s32.totalorder %s24, 1
      %s352 = scalar_select %p351, %s24, 1
      %s353 = scalar_lea.vmem %s4, %s352
      %p354 = pneg %p187
      %p355 = pneg %p184
      %p356 = scmp.lt.s32.totalorder %s24, 1
      %s357 = scalar_select %p356, %s24, 1
      %s358 = smul.addr %s357, 8
      %s359 = scalar_lea.vmem %s5, %s358
      %p360 = pneg %p213
      %p361 = pneg %p210
      %p362 = scmp.lt.s32.totalorder %s24, 1
      %s363 = scalar_select %p362, %s24, 1
      %s364 = smul.addr %s363, 8
      %s365 = scalar_lea.vmem %s6, %s364
      %p366 = pneg %p239
      %p367 = pneg %p236
      %p368 = scmp.lt.s32.totalorder %s24, 1
      %s369 = scalar_select %p368, %s24, 1
      %s370 = smul.addr %s369, 8
      %s371 = scalar_lea.vmem %s7, %s370
      %p372 = pneg %p265
      %p373 = pneg %p262
      %p374 = scmp.lt.s32.totalorder %s24, 1
      %s375 = scalar_select %p374, %s24, 1
      %s376 = smul.addr %s375, 8
      %s377 = scalar_lea.vmem %s8, %s376
      %s378 = smul.u32 4, %s25
      %p379 = scmp.lt.s32.totalorder %s24, 1
      %s380 = scalar_select %p379, %s24, 1
      %p381 = scmp.lt.s32.totalorder %s378, 3
      %s382 = scalar_select %p381, %s378, 3
      %s383 = smul.addr %s380, 4
      %s384 = sadd.s32 %s382, %s383
      %s385 = smul.addr %s384, 8
      %s386 = scalar_lea.vmem %s0, %s385
      %s387 = smul.u32 4, %s25
      %s388 = smul.u32 4, %s25
      %p389 = scmp.lt.s32.totalorder %s24, 1
      %s390 = scalar_select %p389, %s24, 1
      %p391 = scmp.lt.s32.totalorder %s388, 3
      %s392 = scalar_select %p391, %s388, 3
      %s393 = smul.addr %s390, 4
      %s394 = sadd.s32 %s392, %s393
      %s395 = smul.addr %s394, 8
      %s396 = scalar_lea.vmem %s1, %s395
      %s397 = smul.u32 4, %s25
      %p398 = scmp.lt.s32.totalorder %s24, 1
      %s399 = scalar_select %p398, %s24, 1
      %s400 = scalar_lea.vmem %s2, %s399
      %p401 = scmp.lt.s32.totalorder %s24, 1
      %s402 = scalar_select %p401, %s24, 1
      %s403 = scalar_lea.vmem %s3, %s402
      %p404 = scmp.lt.s32.totalorder %s24, 1
      %s405 = scalar_select %p404, %s24, 1
      %s406 = scalar_lea.vmem %s4, %s405
      %p407 = scmp.lt.s32.totalorder %s24, 1
      %s408 = scalar_select %p407, %s24, 1
      %s409 = smul.addr %s408, 8
      %s410 = scalar_lea.vmem %s5, %s409
      %p411 = scmp.lt.s32.totalorder %s24, 1
      %s412 = scalar_select %p411, %s24, 1
      %s413 = smul.addr %s412, 8
      %s414 = scalar_lea.vmem %s6, %s413
      %p415 = scmp.lt.s32.totalorder %s24, 1
      %s416 = scalar_select %p415, %s24, 1
      %s417 = smul.addr %s416, 8
      %s418 = scalar_lea.vmem %s7, %s417
      %p419 = scmp.lt.s32.totalorder %s24, 1
      %s420 = scalar_select %p419, %s24, 1
      %s421 = smul.addr %s420, 8
      %s422 = scalar_lea.vmem %s8, %s421
      %p423 = scmp.eq.s32.totalorder %s25, 0
      // Predicated region
      $region29: #{latent_similarity_loss.1} parent=27 // pred_check
        %p424 = pneg %p423
      $region30: #{latent_similarity_loss.1} parent=27 // pred_check_branch
        %426 = sbr.rel (%p424) target = $region32
      $region31: #{latent_similarity_loss.1} parent=27 // pred_region
        %427 = vst [vmem:[#allocation2] sm:$0xff] 0.0
        %428 = vst [vmem:[#allocation2 + $0x8] sm:$0xff] 0.0
        %429 = vst [vmem:[#allocation2 + $0x10] sm:$0xff] 0.0
        %430 = vst [vmem:[#allocation2 + $0x18] sm:$0xff] 0.0
        %431 = vst [vmem:[#allocation3] sm:$0xff] 0.0
        %432 = vst [vmem:[#allocation3 + $0x8] sm:$0xff] 0.0
        %433 = vst [vmem:[#allocation3 + $0x10] sm:$0xff] 0.0
        %434 = vst [vmem:[#allocation3 + $0x18] sm:$0xff] 0.0
        %v435 = vlaneseq
        %vm436 = vcmp.ge.s32.totalorder %v435, 0
        %vm437 = vcmp.lt.s32.totalorder %v435, 512
        %vm438 = vmand %vm436, %vm437
        %439 = vst.msk [vmem:[#allocation4] sm:$0xf] %vm438, 0.0
        %vm440 = vcmask 7168
        %441 = vst.msk [vmem:[%s410] sm:$0xff] %vm440, 0.0
        %442 = vst.msk [vmem:[%s414] sm:$0xff] %vm440, 0.0
        %vm443 = vcmask 64512
        %444 = vst.msk [vmem:[%s418] sm:$0xff] %vm443, 0.0
        %445 = vst.msk [vmem:[%s422] sm:$0xff] %vm443, 0.0
      $region32: #{latent_similarity_loss.1} parent=27 // pred_fallthru
        _
      %v446 = vld [vmem:[%s386] sm:$0xff]
      %v447 = vld [vmem:[%s386 + $0x8] sm:$0xff]
      %v448 = vld [vmem:[%s386 + $0x10] sm:$0xff]
      %v449 = vld [vmem:[%s386 + $0x18] sm:$0xff]
      %v450 = vld [vmem:[%s396] sm:$0xff]
      %v451 = vld [vmem:[%s396 + $0x8] sm:$0xff]
      %v452 = vld [vmem:[%s396 + $0x10] sm:$0xff]
      %v453 = vld [vmem:[%s396 + $0x18] sm:$0xff]
      %v454 = vsub.f32 %v446, %v450
      %v455 = vsub.f32 %v447, %v451
      %v456 = vsub.f32 %v448, %v452
      %v457 = vsub.f32 %v449, %v453
      %v458 = vmul.f32 %v454, %v454
      %v459 = vmul.f32 %v455, %v455
      %v460 = vmul.f32 %v456, %v456
      %v461 = vmul.f32 %v457, %v457
      %v462 = vld [vmem:[#allocation2] sm:$0xff]
      %v463 = vld [vmem:[#allocation2 + $0x8] sm:$0xff]
      %v464 = vld [vmem:[#allocation2 + $0x10] sm:$0xff]
      %v465 = vld [vmem:[#allocation2 + $0x18] sm:$0xff]
      %v466 = vadd.f32 %v462, %v458
      %v467 = vadd.f32 %v463, %v459
      %v468 = vadd.f32 %v464, %v460
      %v469 = vadd.f32 %v465, %v461
      %470 = vst [vmem:[#allocation2] sm:$0xff] %v466
      %471 = vst [vmem:[#allocation2 + $0x8] sm:$0xff] %v467
      %472 = vst [vmem:[#allocation2 + $0x10] sm:$0xff] %v468
      %473 = vst [vmem:[#allocation2 + $0x18] sm:$0xff] %v469
      %v474 = vand.u32 2147483647, %v454
      %v475 = vand.u32 2147483647, %v455
      %v476 = vand.u32 2147483647, %v456
      %v477 = vand.u32 2147483647, %v457
      %v478 = vld [vmem:[#allocation3] sm:$0xff]
      %v479 = vld [vmem:[#allocation3 + $0x8] sm:$0xff]
      %v480 = vld [vmem:[#allocation3 + $0x10] sm:$0xff]
      %v481 = vld [vmem:[#allocation3 + $0x18] sm:$0xff]
      %vm482 = vcmp.lt.f32.partialorder %v474, 1.0
      %vm483 = vcmp.lt.f32.partialorder %v475, 1.0
      %vm484 = vcmp.lt.f32.partialorder %v476, 1.0
      %vm485 = vcmp.lt.f32.partialorder %v477, 1.0
      %v486 = vmul.f32 %v458, 0.5
      %v487 = vmul.f32 %v459, 0.5
      %v488 = vmul.f32 %v460, 0.5
      %v489 = vmul.f32 %v461, 0.5
      %v490 = vsub.f32 %v474, 0.5
      %v491 = vsub.f32 %v475, 0.5
      %v492 = vsub.f32 %v476, 0.5
      %v493 = vsub.f32 %v477, 0.5
      %v494 = vsel %vm482, %v486, %v490
      %v495 = vsel %vm483, %v487, %v491
      %v496 = vsel %vm484, %v488, %v492
      %v497 = vsel %vm485, %v489, %v493
      %v498 = vadd.f32 %v478, %v494
      %v499 = vadd.f32 %v479, %v495
      %v500 = vadd.f32 %v480, %v496
      %v501 = vadd.f32 %v481, %v497
      %502 = vst [vmem:[#allocation3] sm:$0xff] %v498
      %503 = vst [vmem:[#allocation3 + $0x8] sm:$0xff] %v499
      %504 = vst [vmem:[#allocation3 + $0x10] sm:$0xff] %v500
      %505 = vst [vmem:[#allocation3 + $0x18] sm:$0xff] %v501
      %v506 = vmul.f32 %v446, %v450
      %v507 = vmul.f32 %v447, %v451
      %v508 = vmul.f32 %v448, %v452
      %v509 = vmul.f32 %v449, %v453
      %v510 = vrot.slane %v506, 4
      %v511 = vadd.f32 %v506, %v510
      %v512 = vrot.slane %v511, 2
      %v513 = vadd.f32 %v511, %v512
      %v514 = vrot.slane %v513, 1
      %v515 = vadd.f32 %v513, %v514
      %v516 = vrot.slane %v507, 4
      %v517 = vadd.f32 %v507, %v516
      %v518 = vrot.slane %v517, 2
      %v519 = vadd.f32 %v517, %v518
      %v520 = vrot.slane %v519, 1
      %v521 = vadd.f32 %v519, %v520
      %v522 = vrot.slane %v508, 4
      %v523 = vadd.f32 %v508, %v522
      %v524 = vrot.slane %v523, 2
      %v525 = vadd.f32 %v523, %v524
      %v526 = vrot.slane %v525, 1
      %v527 = vadd.f32 %v525, %v526
      %v528 = vrot.slane %v509, 4
      %v529 = vadd.f32 %v509, %v528
      %v530 = vrot.slane %v529, 2
      %v531 = vadd.f32 %v529, %v530
      %v532 = vrot.slane %v531, 1
      %v533 = vadd.f32 %v531, %v532
      %v534 = vmul.f32 %v446, %v446
      %v535 = vmul.f32 %v447, %v447
      %v536 = vmul.f32 %v448, %v448
      %v537 = vmul.f32 %v449, %v449
      %v538 = vrot.slane %v534, 4
      %v539 = vadd.f32 %v534, %v538
      %v540 = vrot.slane %v539, 2
      %v541 = vadd.f32 %v539, %v540
      %v542 = vrot.slane %v541, 1
      %v543 = vadd.f32 %v541, %v542
      %v544 = vrot.slane %v535, 4
      %v545 = vadd.f32 %v535, %v544
      %v546 = vrot.slane %v545, 2
      %v547 = vadd.f32 %v545, %v546
      %v548 = vrot.slane %v547, 1
      %v549 = vadd.f32 %v547, %v548
      %v550 = vrot.slane %v536, 4
      %v551 = vadd.f32 %v536, %v550
      %v552 = vrot.slane %v551, 2
      %v553 = vadd.f32 %v551, %v552
      %v554 = vrot.slane %v553, 1
      %v555 = vadd.f32 %v553, %v554
      %v556 = vrot.slane %v537, 4
      %v557 = vadd.f32 %v537, %v556
      %v558 = vrot.slane %v557, 2
      %v559 = vadd.f32 %v557, %v558
      %v560 = vrot.slane %v559, 1
      %v561 = vadd.f32 %v559, %v560
      %v562 = vmul.f32 %v450, %v450
      %v563 = vmul.f32 %v451, %v451
      %v564 = vmul.f32 %v452, %v452
      %v565 = vmul.f32 %v453, %v453
      %v566 = vrot.slane %v562, 4
      %v567 = vadd.f32 %v562, %v566
      %v568 = vrot.slane %v567, 2
      %v569 = vadd.f32 %v567, %v568
      %v570 = vrot.slane %v569, 1
      %v571 = vadd.f32 %v569, %v570
      %v572 = vrot.slane %v563, 4
      %v573 = vadd.f32 %v563, %v572
      %v574 = vrot.slane %v573, 2
      %v575 = vadd.f32 %v573, %v574
      %v576 = vrot.slane %v575, 1
      %v577 = vadd.f32 %v575, %v576
      %v578 = vrot.slane %v564, 4
      %v579 = vadd.f32 %v564, %v578
      %v580 = vrot.slane %v579, 2
      %v581 = vadd.f32 %v579, %v580
      %v582 = vrot.slane %v581, 1
      %v583 = vadd.f32 %v581, %v582
      %v584 = vrot.slane %v565, 4
      %v585 = vadd.f32 %v565, %v584
      %v586 = vrot.slane %v585, 2
      %v587 = vadd.f32 %v585, %v586
      %v588 = vrot.slane %v587, 1
      %v589 = vadd.f32 %v587, %v588
      %v590 = vmul.f32 %v543, %v571
      %v591 = vmul.f32 %v549, %v577
      %v592 = vmul.f32 %v555, %v583
      %v593 = vmul.f32 %v561, %v589
      %v594 = vld [vmem:[#allocation4] sm:$0xf]
      %v595 = vmax.f32 %v590, 1e-16
      %v596 = vmax.f32 %v591, 1e-16
      %v597 = vmax.f32 %v592, 1e-16
      %v598 = vmax.f32 %v593, 1e-16
      %v599 = vrsqrt.pop %v595
      %v600 = vrsqrt.pop %v596
      %v601 = vrsqrt.pop %v597
      %v602 = vrsqrt.pop %v598
      %v603 = vmul.f32 %v515, %v599
      %v604 = vmul.f32 %v521, %v600
      %v605 = vmul.f32 %v527, %v601
      %v606 = vmul.f32 %v533, %v602
      %v611 = vcombine.low %v603, %v604
      %v612 = vcombine.low %v605, %v606
      %v614 = vunpack.c.l.s4 1966171168
      %v615 = vunpack.c.0.s8 %v614
      %v616 = vlaneseq
      %v617 = vshrl.u32 %v616, 7
      %v618 = vsub.s32 %v615, %v617
      %v619 = vrot.slane %v611, %v618
      %v621 = vunpack.c.l.s4 1966171168
      %v622 = vunpack.c.0.s8 %v621
      %v623 = vlaneseq
      %v624 = vshrl.u32 %v623, 7
      %v625 = vsub.s32 %v622, %v624
      %v626 = vrot.slane %v612, %v625
      %v627 = vcombine.low %v619, %v626
      %v629 = vunpack.c.l.s4 1966171168
      %v630 = vunpack.c.0.s8 %v629
      %v631 = vlaneseq
      %v632 = vshrl.u32 %v631, 7
      %v633 = vsub.s32 %v630, %v632
      %v634 = vrot.slane %v627, %v633
      %v636 = vadd.f32 %v594, %v634
      %v637 = vlaneseq
      %vm638 = vcmp.ge.s32.totalorder %v637, 0
      %vm639 = vcmp.lt.s32.totalorder %v637, 512
      %vm640 = vmand %vm638, %vm639
      %641 = vst.msk [vmem:[#allocation4] sm:$0xf] %vm640, %v636
      %v642 = vld [vmem:[%s410] sm:$0xff]
      %v643 = vadd.f32 %v446, %v447
      %v644 = vadd.f32 %v643, %v448
      %v645 = vadd.f32 %v644, %v449
      %646 = vadd.xlane.f32.xlu0 %v645
      %v647 = vpop.xlane.xlu0 %646
      %v648 = vadd.f32 %v642, %v647
      %vm649 = vcmask 7168
      %650 = vst.msk [vmem:[%s410] sm:$0xff] %vm649, %v648
      %v651 = vld [vmem:[%s414] sm:$0xff]
      %v652 = vadd.f32 %v450, %v451
      %v653 = vadd.f32 %v652, %v452
      %v654 = vadd.f32 %v653, %v453
      %655 = vadd.xlane.f32.xlu0 %v654
      %v656 = vpop.xlane.xlu0 %655
      %v657 = vadd.f32 %v651, %v656
      %658 = vst.msk [vmem:[%s414] sm:$0xff] %vm649, %v657
      %v659 = vld [vmem:[%s418] sm:$0xff]
      %660 = vmatprep.subr.mxu0 %v447
      %661 = vmatpush1.xpose.msra.mxu0 %v446
      %662 = vmatprep.subr.mxu0 0.0
      %663 = vmatpush1.xpose.msra.mxu0 0.0
      %664 = vmatprep.subr.mxu0 0.0
      %665 = vmatpush1.xpose.msra.mxu0 0.0
      %666 = vmatprep.subr.mxu0 0.0
      %667 = vmatpush1.xpose.msra.mxu0 0.0
      %668 = vmatprep.subr.mxu0 0.0
      %669 = vmatpush1.xpose.msra.mxu0 0.0
      %670 = vmatprep.subr.mxu0 0.0
      %671 = vmatpush1.xpose.msra.mxu0 0.0
      %672 = vmatprep.subr.mxu0 0.0
      %673 = vmatpush1.xpose.msra.mxu0 0.0
      %674 = vmatprep.subr.mxu0 0.0
      %675 = vmatpush1.xpose.msra.mxu0 0.0
      %676 = vmatprep.subr.mxu0 0.0
      %677 = vmatpush1.xpose.msra.mxu0 0.0
      %678 = vmatprep.subr.mxu0 0.0
      %679 = vmatpush1.xpose.msra.mxu0 0.0
      %680 = vmatprep.subr.mxu0 0.0
      %681 = vmatpush1.xpose.msra.mxu0 0.0
      %682 = vmatprep.subr.mxu0 0.0
      %683 = vmatpush1.xpose.msra.mxu0 0.0
      %684 = vmatprep.subr.mxu0 0.0
      %685 = vmatpush1.xpose.msra.mxu0 0.0
      %686 = vmatprep.subr.mxu0 0.0
      %687 = vmatpush1.xpose.msra.mxu0 0.0
      %688 = vmatprep.subr.mxu0 0.0
      %689 = vmatpush1.xpose.msra.mxu0 0.0
      %690 = vmatprep.subr.mxu0 0.0
      %691 = vmatpush1.xpose.msra.mxu0 0.0
      %692 = vmatprep.subr.mxu0 0.0
      %693 = vmatpush1.xpose.msra.mxu0 0.0
      %694 = vmatprep.subr.mxu0 0.0
      %695 = vmatpush1.xpose.msra.mxu0 0.0
      %696 = vmatprep.subr.mxu0 0.0
      %697 = vmatpush1.xpose.msra.mxu0 0.0
      %698 = vmatprep.subr.mxu0 0.0
      %699 = vmatpush1.xpose.msra.mxu0 0.0
      %700 = vmatprep.subr.mxu0 0.0
      %701 = vmatpush1.xpose.msra.mxu0 0.0
      %702 = vmatprep.subr.mxu0 0.0
      %703 = vmatpush1.xpose.msra.mxu0 0.0
      %704 = vmatprep.subr.mxu0 0.0
      %705 = vmatpush1.xpose.msra.mxu0 0.0
      %706 = vmatprep.subr.mxu0 0.0
      %707 = vmatpush1.xpose.msra.mxu0 0.0
      %708 = vmatprep.subr.mxu0 0.0
      %709 = vmatpush1.xpose.msra.mxu0 0.0
      %710 = vmatprep.subr.mxu0 0.0
      %711 = vmatpush1.xpose.msra.mxu0 0.0
      %712 = vmatprep.subr.mxu0 0.0
      %713 = vmatpush1.xpose.msra.mxu0 0.0
      %714 = vmatprep.subr.mxu0 0.0
      %715 = vmatpush1.xpose.msra.mxu0 0.0
      %716 = vmatprep.subr.mxu0 0.0
      %717 = vmatpush1.xpose.msra.mxu0 0.0
      %718 = vmatprep.subr.mxu0 0.0
      %719 = vmatpush1.xpose.msra.mxu0 0.0
      %720 = vmatprep.subr.mxu0 0.0
      %721 = vmatpush1.xpose.msra.mxu0 0.0
      %722 = vmatprep.subr.mxu0 0.0
      %723 = vmatpush1.xpose.msra.mxu0 0.0
      %724 = vmatprep.mubr.f32.mxu0 %v447
      %725 = vmatmul.mubr.f32.gmra.mrb[0].mxu0 %v446
      %v726 = vpop.f32.mrb[0].mxu0
      %v727 = vadd.f32 0.0, %v726
      %v728 = vpop.f32.mrb[0].mxu0
      %729 = vdwg.mxu0
      %730 = vmatprep.subr.mxu0 %v449
      %731 = vmatpush1.xpose.msra.mxu0 %v448
      %732 = vmatprep.subr.mxu0 0.0
      %733 = vmatpush1.xpose.msra.mxu0 0.0
      %734 = vmatprep.subr.mxu0 0.0
      %735 = vmatpush1.xpose.msra.mxu0 0.0
      %736 = vmatprep.subr.mxu0 0.0
      %737 = vmatpush1.xpose.msra.mxu0 0.0
      %738 = vmatprep.subr.mxu0 0.0
      %739 = vmatpush1.xpose.msra.mxu0 0.0
      %740 = vmatprep.subr.mxu0 0.0
      %741 = vmatpush1.xpose.msra.mxu0 0.0
      %742 = vmatprep.subr.mxu0 0.0
      %743 = vmatpush1.xpose.msra.mxu0 0.0
      %744 = vmatprep.subr.mxu0 0.0
      %745 = vmatpush1.xpose.msra.mxu0 0.0
      %746 = vmatprep.subr.mxu0 0.0
      %747 = vmatpush1.xpose.msra.mxu0 0.0
      %748 = vmatprep.subr.mxu0 0.0
      %749 = vmatpush1.xpose.msra.mxu0 0.0
      %750 = vmatprep.subr.mxu0 0.0
      %751 = vmatpush1.xpose.msra.mxu0 0.0
      %752 = vmatprep.subr.mxu0 0.0
      %753 = vmatpush1.xpose.msra.mxu0 0.0
      %754 = vmatprep.subr.mxu0 0.0
      %755 = vmatpush1.xpose.msra.mxu0 0.0
      %756 = vmatprep.subr.mxu0 0.0
      %757 = vmatpush1.xpose.msra.mxu0 0.0
      %758 = vmatprep.subr.mxu0 0.0
      %759 = vmatpush1.xpose.msra.mxu0 0.0
      %760 = vmatprep.subr.mxu0 0.0
      %761 = vmatpush1.xpose.msra.mxu0 0.0
      %762 = vmatprep.subr.mxu0 0.0
      %763 = vmatpush1.xpose.msra.mxu0 0.0
      %764 = vmatprep.subr.mxu0 0.0
      %765 = vmatpush1.xpose.msra.mxu0 0.0
      %766 = vmatprep.subr.mxu0 0.0
      %767 = vmatpush1.xpose.msra.mxu0 0.0
      %768 = vmatprep.subr.mxu0 0.0
      %769 = vmatpush1.xpose.msra.mxu0 0.0
      %770 = vmatprep.subr.mxu0 0.0
      %771 = vmatpush1.xpose.msra.mxu0 0.0
      %772 = vmatprep.subr.mxu0 0.0
      %773 = vmatpush1.xpose.msra.mxu0 0.0
      %774 = vmatprep.subr.mxu0 0.0
      %775 = vmatpush1.xpose.msra.mxu0 0.0
      %776 = vmatprep.subr.mxu0 0.0
      %777 = vmatpush1.xpose.msra.mxu0 0.0
      %778 = vmatprep.subr.mxu0 0.0
      %779 = vmatpush1.xpose.msra.mxu0 0.0
      %780 = vmatprep.subr.mxu0 0.0
      %781 = vmatpush1.xpose.msra.mxu0 0.0
      %782 = vmatprep.subr.mxu0 0.0
      %783 = vmatpush1.xpose.msra.mxu0 0.0
      %784 = vmatprep.subr.mxu0 0.0
      %785 = vmatpush1.xpose.msra.mxu0 0.0
      %786 = vmatprep.subr.mxu0 0.0
      %787 = vmatpush1.xpose.msra.mxu0 0.0
      %788 = vmatprep.subr.mxu0 0.0
      %789 = vmatpush1.xpose.msra.mxu0 0.0
      %790 = vmatprep.subr.mxu0 0.0
      %791 = vmatpush1.xpose.msra.mxu0 0.0
      %792 = vmatprep.subr.mxu0 0.0
      %793 = vmatpush1.xpose.msra.mxu0 0.0
      %794 = vmatprep.mubr.f32.mxu0 %v449
      %795 = vmatmul.mubr.f32.gmra.mrb[0].mxu0 %v448
      %v796 = vpop.f32.mrb[0].mxu0
      %v797 = vadd.f32 %v727, %v796
      %v798 = vpop.f32.mrb[0].mxu0
      %799 = vdwg.mxu0
      %v800 = vadd.f32 %v659, %v797
      %vm801 = vcmask 64512
      %802 = vst.msk [vmem:[%s418] sm:$0xff] %vm801, %v800
      %v803 = vld [vmem:[%s422] sm:$0xff]
      %804 = vmatprep.subr.mxu0 %v451
      %805 = vmatpush1.xpose.msra.mxu0 %v450
      %806 = vmatprep.subr.mxu0 0.0
      %807 = vmatpush1.xpose.msra.mxu0 0.0
      %808 = vmatprep.subr.mxu0 0.0
      %809 = vmatpush1.xpose.msra.mxu0 0.0
      %810 = vmatprep.subr.mxu0 0.0
      %811 = vmatpush1.xpose.msra.mxu0 0.0
      %812 = vmatprep.subr.mxu0 0.0
      %813 = vmatpush1.xpose.msra.mxu0 0.0
      %814 = vmatprep.subr.mxu0 0.0
      %815 = vmatpush1.xpose.msra.mxu0 0.0
      %816 = vmatprep.subr.mxu0 0.0
      %817 = vmatpush1.xpose.msra.mxu0 0.0
      %818 = vmatprep.subr.mxu0 0.0
      %819 = vmatpush1.xpose.msra.mxu0 0.0
      %820 = vmatprep.subr.mxu0 0.0
      %821 = vmatpush1.xpose.msra.mxu0 0.0
      %822 = vmatprep.subr.mxu0 0.0
      %823 = vmatpush1.xpose.msra.mxu0 0.0
      %824 = vmatprep.subr.mxu0 0.0
      %825 = vmatpush1.xpose.msra.mxu0 0.0
      %826 = vmatprep.subr.mxu0 0.0
      %827 = vmatpush1.xpose.msra.mxu0 0.0
      %828 = vmatprep.subr.mxu0 0.0
      %829 = vmatpush1.xpose.msra.mxu0 0.0
      %830 = vmatprep.subr.mxu0 0.0
      %831 = vmatpush1.xpose.msra.mxu0 0.0
      %832 = vmatprep.subr.mxu0 0.0
      %833 = vmatpush1.xpose.msra.mxu0 0.0
      %834 = vmatprep.subr.mxu0 0.0
      %835 = vmatpush1.xpose.msra.mxu0 0.0
      %836 = vmatprep.subr.mxu0 0.0
      %837 = vmatpush1.xpose.msra.mxu0 0.0
      %838 = vmatprep.subr.mxu0 0.0
      %839 = vmatpush1.xpose.msra.mxu0 0.0
      %840 = vmatprep.subr.mxu0 0.0
      %841 = vmatpush1.xpose.msra.mxu0 0.0
      %842 = vmatprep.subr.mxu0 0.0
      %843 = vmatpush1.xpose.msra.mxu0 0.0
      %844 = vmatprep.subr.mxu0 0.0
      %845 = vmatpush1.xpose.msra.mxu0 0.0
      %846 = vmatprep.subr.mxu0 0.0
      %847 = vmatpush1.xpose.msra.mxu0 0.0
      %848 = vmatprep.subr.mxu0 0.0
      %849 = vmatpush1.xpose.msra.mxu0 0.0
      %850 = vmatprep.subr.mxu0 0.0
      %851 = vmatpush1.xpose.msra.mxu0 0.0
      %852 = vmatprep.subr.mxu0 0.0
      %853 = vmatpush1.xpose.msra.mxu0 0.0
      %854 = vmatprep.subr.mxu0 0.0
      %855 = vmatpush1.xpose.msra.mxu0 0.0
      %856 = vmatprep.subr.mxu0 0.0
      %857 = vmatpush1.xpose.msra.mxu0 0.0
      %858 = vmatprep.subr.mxu0 0.0
      %859 = vmatpush1.xpose.msra.mxu0 0.0
      %860 = vmatprep.subr.mxu0 0.0
      %861 = vmatpush1.xpose.msra.mxu0 0.0
      %862 = vmatprep.subr.mxu0 0.0
      %863 = vmatpush1.xpose.msra.mxu0 0.0
      %864 = vmatprep.subr.mxu0 0.0
      %865 = vmatpush1.xpose.msra.mxu0 0.0
      %866 = vmatprep.subr.mxu0 0.0
      %867 = vmatpush1.xpose.msra.mxu0 0.0
      %868 = vmatprep.mubr.f32.mxu0 %v451
      %869 = vmatmul.mubr.f32.gmra.mrb[0].mxu0 %v450
      %v870 = vpop.f32.mrb[0].mxu0
      %v871 = vadd.f32 0.0, %v870
      %v872 = vpop.f32.mrb[0].mxu0
      %873 = vdwg.mxu0
      %874 = vmatprep.subr.mxu0 %v453
      %875 = vmatpush1.xpose.msra.mxu0 %v452
      %876 = vmatprep.subr.mxu0 0.0
      %877 = vmatpush1.xpose.msra.mxu0 0.0
      %878 = vmatprep.subr.mxu0 0.0
      %879 = vmatpush1.xpose.msra.mxu0 0.0
      %880 = vmatprep.subr.mxu0 0.0
      %881 = vmatpush1.xpose.msra.mxu0 0.0
      %882 = vmatprep.subr.mxu0 0.0
      %883 = vmatpush1.xpose.msra.mxu0 0.0
      %884 = vmatprep.subr.mxu0 0.0
      %885 = vmatpush1.xpose.msra.mxu0 0.0
      %886 = vmatprep.subr.mxu0 0.0
      %887 = vmatpush1.xpose.msra.mxu0 0.0
      %888 = vmatprep.subr.mxu0 0.0
      %889 = vmatpush1.xpose.msra.mxu0 0.0
      %890 = vmatprep.subr.mxu0 0.0
      %891 = vmatpush1.xpose.msra.mxu0 0.0
      %892 = vmatprep.subr.mxu0 0.0
      %893 = vmatpush1.xpose.msra.mxu0 0.0
      %894 = vmatprep.subr.mxu0 0.0
      %895 = vmatpush1.xpose.msra.mxu0 0.0
      %896 = vmatprep.subr.mxu0 0.0
      %897 = vmatpush1.xpose.msra.mxu0 0.0
      %898 = vmatprep.subr.mxu0 0.0
      %899 = vmatpush1.xpose.msra.mxu0 0.0
      %900 = vmatprep.subr.mxu0 0.0
      %901 = vmatpush1.xpose.msra.mxu0 0.0
      %902 = vmatprep.subr.mxu0 0.0
      %903 = vmatpush1.xpose.msra.mxu0 0.0
      %904 = vmatprep.subr.mxu0 0.0
      %905 = vmatpush1.xpose.msra.mxu0 0.0
      %906 = vmatprep.subr.mxu0 0.0
      %907 = vmatpush1.xpose.msra.mxu0 0.0
      %908 = vmatprep.subr.mxu0 0.0
      %909 = vmatpush1.xpose.msra.mxu0 0.0
      %910 = vmatprep.subr.mxu0 0.0
      %911 = vmatpush1.xpose.msra.mxu0 0.0
      %912 = vmatprep.subr.mxu0 0.0
      %913 = vmatpush1.xpose.msra.mxu0 0.0
      %914 = vmatprep.subr.mxu0 0.0
      %915 = vmatpush1.xpose.msra.mxu0 0.0
      %916 = vmatprep.subr.mxu0 0.0
      %917 = vmatpush1.xpose.msra.mxu0 0.0
      %918 = vmatprep.subr.mxu0 0.0
      %919 = vmatpush1.xpose.msra.mxu0 0.0
      %920 = vmatprep.subr.mxu0 0.0
      %921 = vmatpush1.xpose.msra.mxu0 0.0
      %922 = vmatprep.subr.mxu0 0.0
      %923 = vmatpush1.xpose.msra.mxu0 0.0
      %924 = vmatprep.subr.mxu0 0.0
      %925 = vmatpush1.xpose.msra.mxu0 0.0
      %926 = vmatprep.subr.mxu0 0.0
      %927 = vmatpush1.xpose.msra.mxu0 0.0
      %928 = vmatprep.subr.mxu0 0.0
      %929 = vmatpush1.xpose.msra.mxu0 0.0
      %930 = vmatprep.subr.mxu0 0.0
      %931 = vmatpush1.xpose.msra.mxu0 0.0
      %932 = vmatprep.subr.mxu0 0.0
      %933 = vmatpush1.xpose.msra.mxu0 0.0
      %934 = vmatprep.subr.mxu0 0.0
      %935 = vmatpush1.xpose.msra.mxu0 0.0
      %936 = vmatprep.subr.mxu0 0.0
      %937 = vmatpush1.xpose.msra.mxu0 0.0
      %938 = vmatprep.mubr.f32.mxu0 %v453
      %939 = vmatmul.mubr.f32.gmra.mrb[0].mxu0 %v452
      %v940 = vpop.f32.mrb[0].mxu0
      %v941 = vadd.f32 %v871, %v940
      %v942 = vpop.f32.mrb[0].mxu0
      %943 = vdwg.mxu0
      %v944 = vadd.f32 %v803, %v941
      %945 = vst.msk [vmem:[%s422] sm:$0xff] %vm801, %v944
      // Predicated region
      $region33: #{latent_similarity_loss.1} parent=27 // pred_check
        %p946 = pneg %p423
      $region34: #{latent_similarity_loss.1} parent=27 // pred_check_branch
        %948 = sbr.rel (%p946) target = $region36
      $region35: #{latent_similarity_loss.1} parent=27 // pred_region
        %v949 = vld [vmem:[#allocation2] sm:$0xff]
        %v950 = vld [vmem:[#allocation2 + $0x8] sm:$0xff]
        %v951 = vld [vmem:[#allocation2 + $0x10] sm:$0xff]
        %v952 = vld [vmem:[#allocation2 + $0x18] sm:$0xff]
        %v953 = vadd.f32 %v949, %v950
        %v954 = vadd.f32 %v953, %v951
        %v955 = vadd.f32 %v954, %v952
        %956 = vadd.xlane.f32.xlu0 %v955
        %v957 = vpop.xlane.xlu0 %956
        %v958 = vrot.slane %v957, 4
        %v959 = vadd.f32 %v957, %v958
        %v960 = vrot.slane %v959, 2
        %v961 = vadd.f32 %v959, %v960
        %v962 = vrot.slane %v961, 1
        %v963 = vadd.f32 %v961, %v962
        %s964 = vtos %v963
        %v965 = vstv %s964
        %vm966 = vcmask 0
        %967 = vst.msk [vmem:[%s400] sm:$0x1] %vm966, %v965
        %v968 = vld [vmem:[#allocation3] sm:$0xff]
        %v969 = vld [vmem:[#allocation3 + $0x8] sm:$0xff]
        %v970 = vld [vmem:[#allocation3 + $0x10] sm:$0xff]
        %v971 = vld [vmem:[#allocation3 + $0x18] sm:$0xff]
        %v972 = vadd.f32 %v968, %v969
        %v973 = vadd.f32 %v972, %v970
        %v974 = vadd.f32 %v973, %v971
        %975 = vadd.xlane.f32.xlu0 %v974
        %v976 = vpop.xlane.xlu0 %975
        %v977 = vrot.slane %v976, 4
        %v978 = vadd.f32 %v976, %v977
        %v979 = vrot.slane %v978, 2
        %v980 = vadd.f32 %v978, %v979
        %v981 = vrot.slane %v980, 1
        %v982 = vadd.f32 %v980, %v981
        %s983 = vtos %v982
        %v984 = vstv %s983
        %985 = vst.msk [vmem:[%s403] sm:$0x1] %vm966, %v984
        %v986 = vld [vmem:[#allocation4] sm:$0xf]
        %v988 = vlaneseq
        %v989 = vshrl.u32 %v988, 7
        %v990 = vsub.s32 0, %v989
        %v991 = vrot.slane %v986, %v990
        %v992 = vlaneseq
        %v993 = vshrl.u32 %v992, 7
        %v994 = vsub.s32 1, %v993
        %v995 = vrot.slane %v986, %v994
        %v996 = vlaneseq
        %v997 = vshrl.u32 %v996, 7
        %v998 = vsub.s32 2, %v997
        %v999 = vrot.slane %v986, %v998
        %v1000 = vlaneseq
        %v1001 = vshrl.u32 %v1000, 7
        %v1002 = vsub.s32 3, %v1001
        %v1003 = vrot.slane %v986, %v1002
        %vm1008 = vcmask 1040384
        %v1009 = vsel %vm1008, %v991, 0.0
        %v1010 = vsel %vm1008, %v995, 0.0
        %v1011 = vadd.f32 %v1009, %v1010
        %v1012 = vsel %vm1008, %v999, 0.0
        %v1013 = vadd.f32 %v1011, %v1012
        %v1014 = vsel %vm1008, %v1003, 0.0
        %v1015 = vadd.f32 %v1013, %v1014
        %1016 = vadd.xlane.f32.xlu0 %v1015
        %v1017 = vpop.xlane.xlu0 %1016
        %v1018 = vrot.slane %v1017, 4
        %v1019 = vadd.f32 %v1017, %v1018
        %v1020 = vrot.slane %v1019, 2
        %v1021 = vadd.f32 %v1019, %v1020
        %v1022 = vrot.slane %v1021, 1
        %v1023 = vadd.f32 %v1021, %v1022
        %s1024 = vtos %v1023
        %v1025 = vstv %s1024
        %1026 = vst.msk [vmem:[%s406] sm:$0x1] %vm966, %v1025
      $region36: #{latent_similarity_loss.1} parent=27 // pred_fallthru
        _
      %p1027 = scmp.lt.s32.totalorder %s24, 1
      %s1028 = scalar_select %p1027, %s24, 1
      %s1029 = scalar_lea.vmem %s2, %s1028
      %p1030 = scmp.lt.s32.totalorder %s24, 1
      %s1031 = scalar_select %p1030, %s24, 1
      %s1032 = scalar_lea.vmem %s3, %s1031
      %p1033 = scmp.lt.s32.totalorder %s24, 1
      %s1034 = scalar_select %p1033, %s24, 1
      %s1035 = scalar_lea.vmem %s4, %s1034
      %p1036 = scmp.lt.s32.totalorder %s24, 1
      %s1037 = scalar_select %p1036, %s24, 1
      %s1038 = smul.addr %s1037, 8
      %s1039 = scalar_lea.vmem %s5, %s1038
      %p1040 = scmp.lt.s32.totalorder %s24, 1
      %s1041 = scalar_select %p1040, %s24, 1
      %s1042 = smul.addr %s1041, 8
      %s1043 = scalar_lea.vmem %s6, %s1042
      %p1044 = scmp.lt.s32.totalorder %s24, 1
      %s1045 = scalar_select %p1044, %s24, 1
      %s1046 = smul.addr %s1045, 8
      %s1047 = scalar_lea.vmem %s7, %s1046
      %p1048 = scmp.lt.s32.totalorder %s24, 1
      %s1049 = scalar_select %p1048, %s24, 1
      %s1050 = smul.addr %s1049, 8
      %s1051 = scalar_lea.vmem %s8, %s1050
      // Predicated region
      $region37: #{latent_similarity_loss.1} parent=27 // pred_check
        %p1052 = pneg %p106
      $region38: #{latent_similarity_loss.1} parent=27 // pred_check_branch
        %1054 = sbr.rel (%p1052) target = $region40
      $region39: #{latent_similarity_loss.1} parent=27 // pred_region
        _
      $region40: #{latent_similarity_loss.1} parent=27 // pred_fallthru
        _
      // Predicated region
      $region41: #{latent_similarity_loss.1} parent=27 // pred_check
        %p1055 = pneg %p132
      $region42: #{latent_similarity_loss.1} parent=27 // pred_check_branch
        %1057 = sbr.rel (%p1055) target = $region44
      $region43: #{latent_similarity_loss.1} parent=27 // pred_region
        _
      $region44: #{latent_similarity_loss.1} parent=27 // pred_fallthru
        _
      // Predicated region
      $region45: #{latent_similarity_loss.1} parent=27 // pred_check
        %p1058 = pneg %p158
      $region46: #{latent_similarity_loss.1} parent=27 // pred_check_branch
        %1060 = sbr.rel (%p1058) target = $region48
      $region47: #{latent_similarity_loss.1} parent=27 // pred_region
        _
      $region48: #{latent_similarity_loss.1} parent=27 // pred_fallthru
        _
      // Predicated region
      $region49: #{latent_similarity_loss.1} parent=27 // pred_check
        %p1061 = pneg %p184
      $region50: #{latent_similarity_loss.1} parent=27 // pred_check_branch
        %1063 = sbr.rel (%p1061) target = $region52
      $region51: #{latent_similarity_loss.1} parent=27 // pred_region
        _
      $region52: #{latent_similarity_loss.1} parent=27 // pred_fallthru
        _
      // Predicated region
      $region53: #{latent_similarity_loss.1} parent=27 // pred_check
        %p1064 = pneg %p210
      $region54: #{latent_similarity_loss.1} parent=27 // pred_check_branch
        %1066 = sbr.rel (%p1064) target = $region56
      $region55: #{latent_similarity_loss.1} parent=27 // pred_region
        _
      $region56: #{latent_similarity_loss.1} parent=27 // pred_fallthru
        _
      // Predicated region
      $region57: #{latent_similarity_loss.1} parent=27 // pred_check
        %p1067 = pneg %p236
      $region58: #{latent_similarity_loss.1} parent=27 // pred_check_branch
        %1069 = sbr.rel (%p1067) target = $region60
      $region59: #{latent_similarity_loss.1} parent=27 // pred_region
        _
      $region60: #{latent_similarity_loss.1} parent=27 // pred_fallthru
        _
      // Predicated region
      $region61: #{latent_similarity_loss.1} parent=27 // pred_check
        %p1070 = pneg %p262
      $region62: #{latent_similarity_loss.1} parent=27 // pred_check_branch
        %1072 = sbr.rel (%p1070) target = $region64
      $region63: #{latent_similarity_loss.1} parent=27 // pred_region
        _
      $region64: #{latent_similarity_loss.1} parent=27 // pred_fallthru
        _
    $region28: #{latent_similarity_loss.1} parent=5 // pred_fallthru
      _
    %p1073 = scmp.le.s32.totalorder 2, %s15
    // Predicated region
    $region65: #{latent_similarity_loss.1} parent=5 // pred_check
      %p1074 = pneg %p1073
    $region66: #{latent_similarity_loss.1} parent=5 // pred_check_branch
      %1076 = sbr.rel (%p1074) target = $region68
    $region67: #{latent_similarity_loss.1} parent=5 // pred_region
      %s1077 = ssub.s32 %s15, 2
      // Predicated region
      $region69: #{latent_similarity_loss.1} parent=67 // pred_check
        %p1078 = pneg %p112
      $region70: #{latent_similarity_loss.1} parent=67 // pred_check_branch
        %1080 = sbr.rel (%p1078) target = $region72
      $region71: #{latent_similarity_loss.1} parent=67 // pred_region
        %p1081 = scmp.lt.s32.totalorder %s26, 1
        %s1082 = scalar_select %p1081, %s26, 1
        %s1083 = scalar_lea.vmem %s2, %s1082
      $region72: #{latent_similarity_loss.1} parent=67 // pred_fallthru
        _
      // Predicated region
      $region73: #{latent_similarity_loss.1} parent=67 // pred_check
        %p1084 = pneg %p138
      $region74: #{latent_similarity_loss.1} parent=67 // pred_check_branch
        %1086 = sbr.rel (%p1084) target = $region76
      $region75: #{latent_similarity_loss.1} parent=67 // pred_region
        %p1087 = scmp.lt.s32.totalorder %s26, 1
        %s1088 = scalar_select %p1087, %s26, 1
        %s1089 = scalar_lea.vmem %s3, %s1088
      $region76: #{latent_similarity_loss.1} parent=67 // pred_fallthru
        _
      // Predicated region
      $region77: #{latent_similarity_loss.1} parent=67 // pred_check
        %p1090 = pneg %p164
      $region78: #{latent_similarity_loss.1} parent=67 // pred_check_branch
        %1092 = sbr.rel (%p1090) target = $region80
      $region79: #{latent_similarity_loss.1} parent=67 // pred_region
        %p1093 = scmp.lt.s32.totalorder %s26, 1
        %s1094 = scalar_select %p1093, %s26, 1
        %s1095 = scalar_lea.vmem %s4, %s1094
      $region80: #{latent_similarity_loss.1} parent=67 // pred_fallthru
        _
      // Predicated region
      $region81: #{latent_similarity_loss.1} parent=67 // pred_check
        %p1096 = pneg %p190
      $region82: #{latent_similarity_loss.1} parent=67 // pred_check_branch
        %1098 = sbr.rel (%p1096) target = $region84
      $region83: #{latent_similarity_loss.1} parent=67 // pred_region
        %p1099 = scmp.lt.s32.totalorder %s26, 1
        %s1100 = scalar_select %p1099, %s26, 1
        %s1101 = smul.addr %s1100, 8
        %s1102 = scalar_lea.vmem %s5, %s1101
      $region84: #{latent_similarity_loss.1} parent=67 // pred_fallthru
        _
      // Predicated region
      $region85: #{latent_similarity_loss.1} parent=67 // pred_check
        %p1103 = pneg %p216
      $region86: #{latent_similarity_loss.1} parent=67 // pred_check_branch
        %1105 = sbr.rel (%p1103) target = $region88
      $region87: #{latent_similarity_loss.1} parent=67 // pred_region
        %p1106 = scmp.lt.s32.totalorder %s26, 1
        %s1107 = scalar_select %p1106, %s26, 1
        %s1108 = smul.addr %s1107, 8
        %s1109 = scalar_lea.vmem %s6, %s1108
      $region88: #{latent_similarity_loss.1} parent=67 // pred_fallthru
        _
      // Predicated region
      $region89: #{latent_similarity_loss.1} parent=67 // pred_check
        %p1110 = pneg %p242
      $region90: #{latent_similarity_loss.1} parent=67 // pred_check_branch
        %1112 = sbr.rel (%p1110) target = $region92
      $region91: #{latent_similarity_loss.1} parent=67 // pred_region
        %p1113 = scmp.lt.s32.totalorder %s26, 1
        %s1114 = scalar_select %p1113, %s26, 1
        %s1115 = smul.addr %s1114, 8
        %s1116 = scalar_lea.vmem %s7, %s1115
      $region92: #{latent_similarity_loss.1} parent=67 // pred_fallthru
        _
      // Predicated region
      $region93: #{latent_similarity_loss.1} parent=67 // pred_check
        %p1117 = pneg %p268
      $region94: #{latent_similarity_loss.1} parent=67 // pred_check_branch
        %1119 = sbr.rel (%p1117) target = $region96
      $region95: #{latent_similarity_loss.1} parent=67 // pred_region
        %p1120 = scmp.lt.s32.totalorder %s26, 1
        %s1121 = scalar_select %p1120, %s26, 1
        %s1122 = smul.addr %s1121, 8
        %s1123 = scalar_lea.vmem %s8, %s1122
      $region96: #{latent_similarity_loss.1} parent=67 // pred_fallthru
        _
    $region68: #{latent_similarity_loss.1} parent=5 // pred_fallthru
      _
  $region6: #{latent_similarity_loss.1} parent=0 // loop_footer
    %s19 = sadd.s32 1, %s15
  $region7: #{latent_similarity_loss.1} parent=0 // loop_footer_branch
    %14 = sbr.rel target = $region3
  $region8: #{latent_similarity_loss.1} parent=0 // loop_exit
    _

</llo_original>
